<compile_context>
chip_gen: v6e
topology: v6e:2x2x1
jax: 0.10.0
libtpu: 0.0.40
codegen_flags: <defaults>
</compile_context>

<pallas_src>
import functools
import math

import jax
import jax.numpy as jnp
import numpy as np
from jax import lax
from jax.experimental import pallas as pl
from jax.experimental.pallas import tpu as pltpu


def _unrolled(n, unroll, body):
    """Run body(r) for r in range(n): fori_loop over groups of `unroll`, Python tail."""
    u = max(1, min(int(unroll), int(n)))
    n_groups = n // u
    start = 0
    if n_groups > 1:
        def outer(j, carry):
            for k in range(u):
                body(j * u + k)
            return carry
        lax.fori_loop(0, n_groups, outer, 0)
        start = n_groups * u
    for r in range(start, n):
        body(r)


def _gather_embed_kernel(ids_ref, lut_hbm, out_ref, buf, sems, *, scale, tm, unroll):
    """One grid step gathers `tm` embedding rows from HBM and scales them.

    ids_ref : (Np,) int32 scalar-prefetch array in SMEM.
    lut_hbm : (vocab, d_model) ref left in HBM (memory_space=pl.ANY).
    out_ref : (tm, d_model) VMEM output tile.
    buf     : (2*tm, d_model) VMEM scratch: two gather landing slots.
    sems    : (2,) DMA semaphores, one per slot (all row copies of a slot share it).
    """
    n_inner = pl.num_programs(1)
    it = pl.program_id(1)
    blk = pl.program_id(0) * n_inner + it          # linear token-block index
    slot = it % 2

    def slot_row0(dst_slot):
        row0 = dst_slot * tm
        if tm % 8 == 0:
            row0 = pl.multiple_of(row0, 8)
        return row0

    def issue_block(linear_blk, dst_slot):
        base = linear_blk * tm
        row0 = slot_row0(dst_slot)

        def issue_row(r):
            tok = ids_ref[base + r]                # scalar SMEM read
            pltpu.make_async_copy(
                lut_hbm.at[pl.ds(tok, 1), :],      # (1, d_model) row in HBM
                buf.at[pl.ds(row0 + r, 1), :],     # landing row in VMEM
                sems.at[dst_slot],
            ).start()

        _unrolled(tm, unroll, issue_row)

    # First inner step of each core-local inner loop primes its own slot.
    @pl.when(it == 0)
    def _():
        issue_block(blk, slot)

    # Prefetch the NEXT block's rows into the other slot BEFORE waiting on the
    # current slot: hides the HBM gather latency behind this step's wait/scale/
    # store (and the output writeback), and keeps every SMEM id read ahead of
    # the first DMA wait (sst->sld forwarding).
    @pl.when(it + 1 < n_inner)
    def _():
        issue_block(blk + 1, 1 - slot)

    # Wait for the current slot's tm row copies (one reconstructed descriptor per
    # issued copy, so signal/wait amounts match exactly).  These waits overlap
    # with the already-in-flight prefetch DMAs for the next block.
    row0 = slot_row0(slot)

    def wait_row(r):
        pltpu.make_async_copy(
            lut_hbm.at[pl.ds(0, 1), :],
            buf.at[pl.ds(row0 + r, 1), :],
            sems.at[slot],
        ).wait()

    _unrolled(tm, unroll, wait_row)

    # Fuse the sqrt(d_model) scale in f32, then cast to the output dtype.
    rows = buf[pl.ds(row0, tm), :]
    out_ref[...] = (rows.astype(jnp.float32) * scale).astype(out_ref.dtype)


def embeddings_forward(x, lut, d_model, *, tokens_per_step=256,
                       vmem_tile_budget_bytes=12 * 1024 * 1024,
                       max_ids_per_call=65536):
    """out[..., :] = lut[x[...], :] * sqrt(d_model).

    x   : integer token ids, any shape
    lut : [vocab, d_model] embedding table
    """
    vocab, dm = lut.shape
    assert dm == d_model
    orig_shape = x.shape
    N = int(np.prod(orig_shape))
    scale = float(math.sqrt(d_model))
    itemsize = int(jnp.dtype(lut.dtype).itemsize)

    # Flatten ids; clamp defensively (an out-of-range id would otherwise drive an
    # out-of-bounds DMA — a hardware fault on TPU).  PyTorch nn.Embedding raises.
    ids = jnp.clip(x.reshape(-1).astype(jnp.int32), 0, vocab - 1)

    # ---- choose tm (tokens per grid step) ---------------------------------
    # Live VMEM ~= 2x output double-buffer + 2x gather landing slots
    #           = 4 * tm * d_model * itemsize.  Keep it inside the tile budget so
    # it also fits v7x (64 MiB physical) and v5e (16 MiB default scoped VMEM).
    align = max(8, 32 // itemsize)              # sublane packing: f32->8, bf16->16, int8->32
    max_tm = max(align, min(int(tokens_per_step),
                            vmem_tile_budget_bytes // max(1, 4 * d_model * itemsize)))
    if N <= max_tm:
        tm, n_pad = N, 0                        # single block == full array extent
    else:
        cap = max(align, (max_tm // align) * align)
        tm = 0
        for t in range(cap, align - 1, -align):  # prefer a divisor of N: no pad, no slice copy
            if N % t == 0:
                tm = t
                break
        if tm < max(align, cap // 2):
            tm = cap
        n_pad = (-N) % tm
    Np = N + n_pad
    if n_pad:
        ids = jnp.pad(ids, (0, n_pad))          # padded tokens gather row 0; sliced off below
    total_blocks = Np // tm
    unroll = 8

    # ---- chunk calls so the scalar-prefetched ids stay bounded in SMEM ----
    blocks_per_call = max(1, int(max_ids_per_call) // tm)

    def run_chunk(ids_chunk, nb):
        n_outer = 2 if (nb >= 4 and nb % 2 == 0) else 1   # balance the two v7x TCs
        n_inner = nb // n_outer
        kernel = functools.partial(_gather_embed_kernel, scale=scale, tm=tm, unroll=unroll)
        return pl.pallas_call(
            kernel,
            out_shape=jax.ShapeDtypeStruct((nb * tm, d_model), lut.dtype),
            grid_spec=pltpu.PrefetchScalarGridSpec(
                num_scalar_prefetch=1,                         # ids -> SMEM
                grid=(n_outer, n_inner),
                in_specs=[pl.BlockSpec(memory_space=pl.ANY)],  # table stays in HBM
                out_specs=pl.BlockSpec(
                    (tm, d_model),
                    lambda o, it, ids_pref: (o * n_inner + it, 0)),
                scratch_shapes=[
                    pltpu.VMEM((2 * tm, d_model), lut.dtype),  # double-buffered landing buffer
                    pltpu.SemaphoreType.DMA((2,)),             # one DMA sem per slot
                ],
            ),
            compiler_params=pltpu.CompilerParams(
                dimension_semantics=("parallel", "arbitrary"),
                vmem_limit_bytes=32 * 1024 * 1024,
            ),
            cost_estimate=pl.CostEstimate(
                flops=int(nb * tm * d_model),                  # just the scale multiply
                transcendentals=0,
                bytes_accessed=int(2 * nb * tm * d_model * itemsize + nb * tm * 4),
            ),
        )(ids_chunk, lut)

    outs = []
    b = 0
    while b < total_blocks:
        nb = min(blocks_per_call, total_blocks - b)
        outs.append(run_chunk(ids[b * tm:(b + nb) * tm], nb))
        b += nb
    out = outs[0] if len(outs) == 1 else jnp.concatenate(outs, axis=0)
    if n_pad:
        out = out[:N]
    return out.reshape(*orig_shape, d_model)


if __name__ == "__main__":
    # Small shapes consistent with the module: batch=2, seq=8, vocab=64, d_model=32
    B, S, vocab, d_model = 2, 8, 64, 32

    key = jax.random.PRNGKey(0)
    k_lut, k_ids = jax.random.split(key)

    # nn.Embedding default init is N(0, 1)
    lut = jax.random.normal(k_lut, (vocab, d_model), dtype=jnp.float32)
    x = jax.random.randint(k_ids, (B, S), 0, vocab, dtype=jnp.int32)

    ref = jnp.take(lut, x, axis=0) * math.sqrt(d_model)

    # 1) Default path: single token block (tm == N), prime-only, no prefetch.
    out = embeddings_forward(x, lut, d_model)
    out = jax.block_until_ready(out)
    np.testing.assert_allclose(np.asarray(out), np.asarray(ref), rtol=1e-5, atol=1e-5)

    # 2) Force multiple token blocks to exercise the double-buffered cross-step
    #    gather prefetch path (tm=8 -> grid inner dim of 2).
    out2 = embeddings_forward(x, lut, d_model, tokens_per_step=8)
    out2 = jax.block_until_ready(out2)
    np.testing.assert_allclose(np.asarray(out2), np.asarray(ref), rtol=1e-5, atol=1e-5)

    print("KERNEL_OK")
</pallas_src>

<mosaic_0001>
module attributes {stable_mosaic.version = 11 : i64} {
  func.func @_gather_embed_kernel(%arg0: i32, %arg1: i32, %arg2: memref<16xi32, #tpu.memory_space<smem>>, %arg3: memref<64x32xf32, #tpu.memory_space<any>>, %arg4: memref<16x32xf32, #tpu.memory_space<vmem>>, %arg5: memref<32x32xf32, #tpu.memory_space<vmem>>, %arg6: memref<2x!tpu.dma_semaphore, #tpu.memory_space<semaphore_mem>>) attributes {dimension_semantics = [#tpu.dimension_semantics<parallel>, #tpu.dimension_semantics<arbitrary>], iteration_bounds = array<i64: 1, 1>, scalar_prefetch = 1 : i64, scratch_operands = 2 : i64, tpu.core_type = #tpu.core_type<tc>, window_params = [{}, {transform_indices = @transform_1, window_bounds = array<i64: 16, 32>}]} {
    %c1_i32 = arith.constant 1 : i32
    %0 = arith.muli %arg0, %c1_i32 : i32
    %1 = arith.addi %0, %arg1 : i32
    %c2_i32 = arith.constant 2 : i32
    %c0_i32 = arith.constant 0 : i32
    %2 = arith.cmpi eq, %c2_i32, %c0_i32 : i32
    %c1_i32_0 = arith.constant 1 : i32
    %3 = arith.select %2, %c1_i32_0, %c2_i32 : i32
    %4 = arith.remsi %arg1, %3 : i32
    %c0_i32_1 = arith.constant 0 : i32
    %5 = arith.cmpi ne, %4, %c0_i32_1 : i32
    %c0_i32_2 = arith.constant 0 : i32
    %6 = arith.cmpi slt, %4, %c0_i32_2 : i32
    %c0_i32_3 = arith.constant 0 : i32
    %7 = arith.cmpi slt, %3, %c0_i32_3 : i32
    %8 = arith.xori %6, %7 : i1
    %9 = arith.andi %8, %5 : i1
    %10 = arith.addi %4, %3 : i32
    %11 = arith.select %9, %10, %4 : i32
    %c0_i32_4 = arith.constant 0 : i32
    %12 = arith.cmpi eq, %arg1, %c0_i32_4 : i32
    %13 = arith.extui %12 : i1 to i32
    %c0_i32_5 = arith.constant 0 : i32
    %14 = arith.cmpi ne, %13, %c0_i32_5 : i32
    scf.if %14 {
      %c16_i32_15 = arith.constant 16 : i32
      %27 = arith.muli %1, %c16_i32_15 : i32
      %c16_i32_16 = arith.constant 16 : i32
      %28 = arith.muli %11, %c16_i32_16 : i32
      %29 = tpu.assume_multiple %28, 8 : i32
      %c0_i32_17 = arith.constant 0 : i32
      %c2_i32_18 = arith.constant 2 : i32
      %30 = arith.addi %c0_i32_17, %c2_i32_18 : i32
      %c1_i32_19 = arith.constant 1 : i32
      scf.for %arg7 = %c0_i32_17 to %30 step %c1_i32_19  : i32 {
        %c8_i32 = arith.constant 8 : i32
        %31 = arith.muli %arg7, %c8_i32 : i32
        %c0_i32_21 = arith.constant 0 : i32
        %32 = arith.addi %31, %c0_i32_21 : i32
        %33 = arith.addi %27, %32 : i32
        %34 = arith.index_cast %33 : i32 to index
        %35 = memref.load %arg2[%34] : memref<16xi32, #tpu.memory_space<smem>>
        %36 = arith.addi %29, %32 : i32
        %c0_i32_22 = arith.constant 0 : i32
        %37 = tpu.memref_slice %arg3[%35, %c0_i32_22] : memref<64x32xf32, #tpu.memory_space<any>> -> memref<1x32xf32, #tpu.memory_space<any>>
        %c0_i32_23 = arith.constant 0 : i32
        %38 = tpu.memref_slice %arg5[%36, %c0_i32_23] : memref<32x32xf32, #tpu.memory_space<vmem>> -> memref<1x32xf32, #tpu.memory_space<vmem>>
        %39 = tpu.memref_slice %arg6[%11] : memref<2x!tpu.dma_semaphore, #tpu.memory_space<semaphore_mem>> -> memref<1x!tpu.dma_semaphore, #tpu.memory_space<semaphore_mem>>
        %40 = tpu.memref_squeeze %39 : memref<1x!tpu.dma_semaphore, #tpu.memory_space<semaphore_mem>> -> memref<!tpu.dma_semaphore, #tpu.memory_space<semaphore_mem>>
        tpu.enqueue_dma source(%37 : memref<1x32xf32, #tpu.memory_space<any>>) target(%38 : memref<1x32xf32, #tpu.memory_space<vmem>>) target_semaphore(%40 : memref<!tpu.dma_semaphore, #tpu.memory_space<semaphore_mem>>)
        %c8_i32_24 = arith.constant 8 : i32
        %41 = arith.muli %arg7, %c8_i32_24 : i32
        %c1_i32_25 = arith.constant 1 : i32
        %42 = arith.addi %41, %c1_i32_25 : i32
        %43 = arith.addi %27, %42 : i32
        %44 = arith.index_cast %43 : i32 to index
        %45 = memref.load %arg2[%44] : memref<16xi32, #tpu.memory_space<smem>>
        %46 = arith.addi %29, %42 : i32
        %c0_i32_26 = arith.constant 0 : i32
        %47 = tpu.memref_slice %arg3[%45, %c0_i32_26] : memref<64x32xf32, #tpu.memory_space<any>> -> memref<1x32xf32, #tpu.memory_space<any>>
        %c0_i32_27 = arith.constant 0 : i32
        %48 = tpu.memref_slice %arg5[%46, %c0_i32_27] : memref<32x32xf32, #tpu.memory_space<vmem>> -> memref<1x32xf32, #tpu.memory_space<vmem>>
        %49 = tpu.memref_slice %arg6[%11] : memref<2x!tpu.dma_semaphore, #tpu.memory_space<semaphore_mem>> -> memref<1x!tpu.dma_semaphore, #tpu.memory_space<semaphore_mem>>
        %50 = tpu.memref_squeeze %49 : memref<1x!tpu.dma_semaphore, #tpu.memory_space<semaphore_mem>> -> memref<!tpu.dma_semaphore, #tpu.memory_space<semaphore_mem>>
        tpu.enqueue_dma source(%47 : memref<1x32xf32, #tpu.memory_space<any>>) target(%48 : memref<1x32xf32, #tpu.memory_space<vmem>>) target_semaphore(%50 : memref<!tpu.dma_semaphore, #tpu.memory_space<semaphore_mem>>)
        %c8_i32_28 = arith.constant 8 : i32
        %51 = arith.muli %arg7, %c8_i32_28 : i32
        %c2_i32_29 = arith.constant 2 : i32
        %52 = arith.addi %51, %c2_i32_29 : i32
        %53 = arith.addi %27, %52 : i32
        %54 = arith.index_cast %53 : i32 to index
        %55 = memref.load %arg2[%54] : memref<16xi32, #tpu.memory_space<smem>>
        %56 = arith.addi %29, %52 : i32
        %c0_i32_30 = arith.constant 0 : i32
        %57 = tpu.memref_slice %arg3[%55, %c0_i32_30] : memref<64x32xf32, #tpu.memory_space<any>> -> memref<1x32xf32, #tpu.memory_space<any>>
        %c0_i32_31 = arith.constant 0 : i32
        %58 = tpu.memref_slice %arg5[%56, %c0_i32_31] : memref<32x32xf32, #tpu.memory_space<vmem>> -> memref<1x32xf32, #tpu.memory_space<vmem>>
        %59 = tpu.memref_slice %arg6[%11] : memref<2x!tpu.dma_semaphore, #tpu.memory_space<semaphore_mem>> -> memref<1x!tpu.dma_semaphore, #tpu.memory_space<semaphore_mem>>
        %60 = tpu.memref_squeeze %59 : memref<1x!tpu.dma_semaphore, #tpu.memory_space<semaphore_mem>> -> memref<!tpu.dma_semaphore, #tpu.memory_space<semaphore_mem>>
        tpu.enqueue_dma source(%57 : memref<1x32xf32, #tpu.memory_space<any>>) target(%58 : memref<1x32xf32, #tpu.memory_space<vmem>>) target_semaphore(%60 : memref<!tpu.dma_semaphore, #tpu.memory_space<semaphore_mem>>)
        %c8_i32_32 = arith.constant 8 : i32
        %61 = arith.muli %arg7, %c8_i32_32 : i32
        %c3_i32 = arith.constant 3 : i32
        %62 = arith.addi %61, %c3_i32 : i32
        %63 = arith.addi %27, %62 : i32
        %64 = arith.index_cast %63 : i32 to index
        %65 = memref.load %arg2[%64] : memref<16xi32, #tpu.memory_space<smem>>
        %66 = arith.addi %29, %62 : i32
        %c0_i32_33 = arith.constant 0 : i32
        %67 = tpu.memref_slice %arg3[%65, %c0_i32_33] : memref<64x32xf32, #tpu.memory_space<any>> -> memref<1x32xf32, #tpu.memory_space<any>>
        %c0_i32_34 = arith.constant 0 : i32
        %68 = tpu.memref_slice %arg5[%66, %c0_i32_34] : memref<32x32xf32, #tpu.memory_space<vmem>> -> memref<1x32xf32, #tpu.memory_space<vmem>>
        %69 = tpu.memref_slice %arg6[%11] : memref<2x!tpu.dma_semaphore, #tpu.memory_space<semaphore_mem>> -> memref<1x!tpu.dma_semaphore, #tpu.memory_space<semaphore_mem>>
        %70 = tpu.memref_squeeze %69 : memref<1x!tpu.dma_semaphore, #tpu.memory_space<semaphore_mem>> -> memref<!tpu.dma_semaphore, #tpu.memory_space<semaphore_mem>>
        tpu.enqueue_dma source(%67 : memref<1x32xf32, #tpu.memory_space<any>>) target(%68 : memref<1x32xf32, #tpu.memory_space<vmem>>) target_semaphore(%70 : memref<!tpu.dma_semaphore, #tpu.memory_space<semaphore_mem>>)
        %c8_i32_35 = arith.constant 8 : i32
        %71 = arith.muli %arg7, %c8_i32_35 : i32
        %c4_i32 = arith.constant 4 : i32
        %72 = arith.addi %71, %c4_i32 : i32
        %73 = arith.addi %27, %72 : i32
        %74 = arith.index_cast %73 : i32 to index
        %75 = memref.load %arg2[%74] : memref<16xi32, #tpu.memory_space<smem>>
        %76 = arith.addi %29, %72 : i32
        %c0_i32_36 = arith.constant 0 : i32
        %77 = tpu.memref_slice %arg3[%75, %c0_i32_36] : memref<64x32xf32, #tpu.memory_space<any>> -> memref<1x32xf32, #tpu.memory_space<any>>
        %c0_i32_37 = arith.constant 0 : i32
        %78 = tpu.memref_slice %arg5[%76, %c0_i32_37] : memref<32x32xf32, #tpu.memory_space<vmem>> -> memref<1x32xf32, #tpu.memory_space<vmem>>
        %79 = tpu.memref_slice %arg6[%11] : memref<2x!tpu.dma_semaphore, #tpu.memory_space<semaphore_mem>> -> memref<1x!tpu.dma_semaphore, #tpu.memory_space<semaphore_mem>>
        %80 = tpu.memref_squeeze %79 : memref<1x!tpu.dma_semaphore, #tpu.memory_space<semaphore_mem>> -> memref<!tpu.dma_semaphore, #tpu.memory_space<semaphore_mem>>
        tpu.enqueue_dma source(%77 : memref<1x32xf32, #tpu.memory_space<any>>) target(%78 : memref<1x32xf32, #tpu.memory_space<vmem>>) target_semaphore(%80 : memref<!tpu.dma_semaphore, #tpu.memory_space<semaphore_mem>>)
        %c8_i32_38 = arith.constant 8 : i32
        %81 = arith.muli %arg7, %c8_i32_38 : i32
        %c5_i32 = arith.constant 5 : i32
        %82 = arith.addi %81, %c5_i32 : i32
        %83 = arith.addi %27, %82 : i32
        %84 = arith.index_cast %83 : i32 to index
        %85 = memref.load %arg2[%84] : memref<16xi32, #tpu.memory_space<smem>>
        %86 = arith.addi %29, %82 : i32
        %c0_i32_39 = arith.constant 0 : i32
        %87 = tpu.memref_slice %arg3[%85, %c0_i32_39] : memref<64x32xf32, #tpu.memory_space<any>> -> memref<1x32xf32, #tpu.memory_space<any>>
        %c0_i32_40 = arith.constant 0 : i32
        %88 = tpu.memref_slice %arg5[%86, %c0_i32_40] : memref<32x32xf32, #tpu.memory_space<vmem>> -> memref<1x32xf32, #tpu.memory_space<vmem>>
        %89 = tpu.memref_slice %arg6[%11] : memref<2x!tpu.dma_semaphore, #tpu.memory_space<semaphore_mem>> -> memref<1x!tpu.dma_semaphore, #tpu.memory_space<semaphore_mem>>
        %90 = tpu.memref_squeeze %89 : memref<1x!tpu.dma_semaphore, #tpu.memory_space<semaphore_mem>> -> memref<!tpu.dma_semaphore, #tpu.memory_space<semaphore_mem>>
        tpu.enqueue_dma source(%87 : memref<1x32xf32, #tpu.memory_space<any>>) target(%88 : memref<1x32xf32, #tpu.memory_space<vmem>>) target_semaphore(%90 : memref<!tpu.dma_semaphore, #tpu.memory_space<semaphore_mem>>)
        %c8_i32_41 = arith.constant 8 : i32
        %91 = arith.muli %arg7, %c8_i32_41 : i32
        %c6_i32 = arith.constant 6 : i32
        %92 = arith.addi %91, %c6_i32 : i32
        %93 = arith.addi %27, %92 : i32
        %94 = arith.index_cast %93 : i32 to index
        %95 = memref.load %arg2[%94] : memref<16xi32, #tpu.memory_space<smem>>
        %96 = arith.addi %29, %92 : i32
        %c0_i32_42 = arith.constant 0 : i32
        %97 = tpu.memref_slice %arg3[%95, %c0_i32_42] : memref<64x32xf32, #tpu.memory_space<any>> -> memref<1x32xf32, #tpu.memory_space<any>>
        %c0_i32_43 = arith.constant 0 : i32
        %98 = tpu.memref_slice %arg5[%96, %c0_i32_43] : memref<32x32xf32, #tpu.memory_space<vmem>> -> memref<1x32xf32, #tpu.memory_space<vmem>>
        %99 = tpu.memref_slice %arg6[%11] : memref<2x!tpu.dma_semaphore, #tpu.memory_space<semaphore_mem>> -> memref<1x!tpu.dma_semaphore, #tpu.memory_space<semaphore_mem>>
        %100 = tpu.memref_squeeze %99 : memref<1x!tpu.dma_semaphore, #tpu.memory_space<semaphore_mem>> -> memref<!tpu.dma_semaphore, #tpu.memory_space<semaphore_mem>>
        tpu.enqueue_dma source(%97 : memref<1x32xf32, #tpu.memory_space<any>>) target(%98 : memref<1x32xf32, #tpu.memory_space<vmem>>) target_semaphore(%100 : memref<!tpu.dma_semaphore, #tpu.memory_space<semaphore_mem>>)
        %c8_i32_44 = arith.constant 8 : i32
        %101 = arith.muli %arg7, %c8_i32_44 : i32
        %c7_i32 = arith.constant 7 : i32
        %102 = arith.addi %101, %c7_i32 : i32
        %103 = arith.addi %27, %102 : i32
        %104 = arith.index_cast %103 : i32 to index
        %105 = memref.load %arg2[%104] : memref<16xi32, #tpu.memory_space<smem>>
        %106 = arith.addi %29, %102 : i32
        %c0_i32_45 = arith.constant 0 : i32
        %107 = tpu.memref_slice %arg3[%105, %c0_i32_45] : memref<64x32xf32, #tpu.memory_space<any>> -> memref<1x32xf32, #tpu.memory_space<any>>
        %c0_i32_46 = arith.constant 0 : i32
        %108 = tpu.memref_slice %arg5[%106, %c0_i32_46] : memref<32x32xf32, #tpu.memory_space<vmem>> -> memref<1x32xf32, #tpu.memory_space<vmem>>
        %109 = tpu.memref_slice %arg6[%11] : memref<2x!tpu.dma_semaphore, #tpu.memory_space<semaphore_mem>> -> memref<1x!tpu.dma_semaphore, #tpu.memory_space<semaphore_mem>>
        %110 = tpu.memref_squeeze %109 : memref<1x!tpu.dma_semaphore, #tpu.memory_space<semaphore_mem>> -> memref<!tpu.dma_semaphore, #tpu.memory_space<semaphore_mem>>
        tpu.enqueue_dma source(%107 : memref<1x32xf32, #tpu.memory_space<any>>) target(%108 : memref<1x32xf32, #tpu.memory_space<vmem>>) target_semaphore(%110 : memref<!tpu.dma_semaphore, #tpu.memory_space<semaphore_mem>>)
      }
      %c2_i32_20 = arith.constant 2 : i32
    } else {
    }
    %c1_i32_6 = arith.constant 1 : i32
    %15 = arith.addi %arg1, %c1_i32_6 : i32
    %c1_i32_7 = arith.constant 1 : i32
    %16 = arith.cmpi slt, %15, %c1_i32_7 : i32
    %17 = arith.extui %16 : i1 to i32
    %c0_i32_8 = arith.constant 0 : i32
    %18 = arith.cmpi ne, %17, %c0_i32_8 : i32
    scf.if %18 {
      %c1_i32_15 = arith.constant 1 : i32
      %27 = arith.addi %1, %c1_i32_15 : i32
      %c1_i32_16 = arith.constant 1 : i32
      %28 = arith.subi %c1_i32_16, %11 : i32
      %c16_i32_17 = arith.constant 16 : i32
      %29 = arith.muli %27, %c16_i32_17 : i32
      %c16_i32_18 = arith.constant 16 : i32
      %30 = arith.muli %28, %c16_i32_18 : i32
      %31 = tpu.assume_multiple %30, 8 : i32
      %c0_i32_19 = arith.constant 0 : i32
      %c2_i32_20 = arith.constant 2 : i32
      %32 = arith.addi %c0_i32_19, %c2_i32_20 : i32
      %c1_i32_21 = arith.constant 1 : i32
      scf.for %arg7 = %c0_i32_19 to %32 step %c1_i32_21  : i32 {
        %c8_i32 = arith.constant 8 : i32
        %33 = arith.muli %arg7, %c8_i32 : i32
        %c0_i32_23 = arith.constant 0 : i32
        %34 = arith.addi %33, %c0_i32_23 : i32
        %35 = arith.addi %29, %34 : i32
        %36 = arith.index_cast %35 : i32 to index
        %37 = memref.load %arg2[%36] : memref<16xi32, #tpu.memory_space<smem>>
        %38 = arith.addi %31, %34 : i32
        %c0_i32_24 = arith.constant 0 : i32
        %39 = tpu.memref_slice %arg3[%37, %c0_i32_24] : memref<64x32xf32, #tpu.memory_space<any>> -> memref<1x32xf32, #tpu.memory_space<any>>
        %c0_i32_25 = arith.constant 0 : i32
        %40 = tpu.memref_slice %arg5[%38, %c0_i32_25] : memref<32x32xf32, #tpu.memory_space<vmem>> -> memref<1x32xf32, #tpu.memory_space<vmem>>
        %41 = tpu.memref_slice %arg6[%28] : memref<2x!tpu.dma_semaphore, #tpu.memory_space<semaphore_mem>> -> memref<1x!tpu.dma_semaphore, #tpu.memory_space<semaphore_mem>>
        %42 = tpu.memref_squeeze %41 : memref<1x!tpu.dma_semaphore, #tpu.memory_space<semaphore_mem>> -> memref<!tpu.dma_semaphore, #tpu.memory_space<semaphore_mem>>
        tpu.enqueue_dma source(%39 : memref<1x32xf32, #tpu.memory_space<any>>) target(%40 : memref<1x32xf32, #tpu.memory_space<vmem>>) target_semaphore(%42 : memref<!tpu.dma_semaphore, #tpu.memory_space<semaphore_mem>>)
        %c8_i32_26 = arith.constant 8 : i32
        %43 = arith.muli %arg7, %c8_i32_26 : i32
        %c1_i32_27 = arith.constant 1 : i32
        %44 = arith.addi %43, %c1_i32_27 : i32
        %45 = arith.addi %29, %44 : i32
        %46 = arith.index_cast %45 : i32 to index
        %47 = memref.load %arg2[%46] : memref<16xi32, #tpu.memory_space<smem>>
        %48 = arith.addi %31, %44 : i32
        %c0_i32_28 = arith.constant 0 : i32
        %49 = tpu.memref_slice %arg3[%47, %c0_i32_28] : memref<64x32xf32, #tpu.memory_space<any>> -> memref<1x32xf32, #tpu.memory_space<any>>
        %c0_i32_29 = arith.constant 0 : i32
        %50 = tpu.memref_slice %arg5[%48, %c0_i32_29] : memref<32x32xf32, #tpu.memory_space<vmem>> -> memref<1x32xf32, #tpu.memory_space<vmem>>
        %51 = tpu.memref_slice %arg6[%28] : memref<2x!tpu.dma_semaphore, #tpu.memory_space<semaphore_mem>> -> memref<1x!tpu.dma_semaphore, #tpu.memory_space<semaphore_mem>>
        %52 = tpu.memref_squeeze %51 : memref<1x!tpu.dma_semaphore, #tpu.memory_space<semaphore_mem>> -> memref<!tpu.dma_semaphore, #tpu.memory_space<semaphore_mem>>
        tpu.enqueue_dma source(%49 : memref<1x32xf32, #tpu.memory_space<any>>) target(%50 : memref<1x32xf32, #tpu.memory_space<vmem>>) target_semaphore(%52 : memref<!tpu.dma_semaphore, #tpu.memory_space<semaphore_mem>>)
        %c8_i32_30 = arith.constant 8 : i32
        %53 = arith.muli %arg7, %c8_i32_30 : i32
        %c2_i32_31 = arith.constant 2 : i32
        %54 = arith.addi %53, %c2_i32_31 : i32
        %55 = arith.addi %29, %54 : i32
        %56 = arith.index_cast %55 : i32 to index
        %57 = memref.load %arg2[%56] : memref<16xi32, #tpu.memory_space<smem>>
        %58 = arith.addi %31, %54 : i32
        %c0_i32_32 = arith.constant 0 : i32
        %59 = tpu.memref_slice %arg3[%57, %c0_i32_32] : memref<64x32xf32, #tpu.memory_space<any>> -> memref<1x32xf32, #tpu.memory_space<any>>
        %c0_i32_33 = arith.constant 0 : i32
        %60 = tpu.memref_slice %arg5[%58, %c0_i32_33] : memref<32x32xf32, #tpu.memory_space<vmem>> -> memref<1x32xf32, #tpu.memory_space<vmem>>
        %61 = tpu.memref_slice %arg6[%28] : memref<2x!tpu.dma_semaphore, #tpu.memory_space<semaphore_mem>> -> memref<1x!tpu.dma_semaphore, #tpu.memory_space<semaphore_mem>>
        %62 = tpu.memref_squeeze %61 : memref<1x!tpu.dma_semaphore, #tpu.memory_space<semaphore_mem>> -> memref<!tpu.dma_semaphore, #tpu.memory_space<semaphore_mem>>
        tpu.enqueue_dma source(%59 : memref<1x32xf32, #tpu.memory_space<any>>) target(%60 : memref<1x32xf32, #tpu.memory_space<vmem>>) target_semaphore(%62 : memref<!tpu.dma_semaphore, #tpu.memory_space<semaphore_mem>>)
        %c8_i32_34 = arith.constant 8 : i32
        %63 = arith.muli %arg7, %c8_i32_34 : i32
        %c3_i32 = arith.constant 3 : i32
        %64 = arith.addi %63, %c3_i32 : i32
        %65 = arith.addi %29, %64 : i32
        %66 = arith.index_cast %65 : i32 to index
        %67 = memref.load %arg2[%66] : memref<16xi32, #tpu.memory_space<smem>>
        %68 = arith.addi %31, %64 : i32
        %c0_i32_35 = arith.constant 0 : i32
        %69 = tpu.memref_slice %arg3[%67, %c0_i32_35] : memref<64x32xf32, #tpu.memory_space<any>> -> memref<1x32xf32, #tpu.memory_space<any>>
        %c0_i32_36 = arith.constant 0 : i32
        %70 = tpu.memref_slice %arg5[%68, %c0_i32_36] : memref<32x32xf32, #tpu.memory_space<vmem>> -> memref<1x32xf32, #tpu.memory_space<vmem>>
        %71 = tpu.memref_slice %arg6[%28] : memref<2x!tpu.dma_semaphore, #tpu.memory_space<semaphore_mem>> -> memref<1x!tpu.dma_semaphore, #tpu.memory_space<semaphore_mem>>
        %72 = tpu.memref_squeeze %71 : memref<1x!tpu.dma_semaphore, #tpu.memory_space<semaphore_mem>> -> memref<!tpu.dma_semaphore, #tpu.memory_space<semaphore_mem>>
        tpu.enqueue_dma source(%69 : memref<1x32xf32, #tpu.memory_space<any>>) target(%70 : memref<1x32xf32, #tpu.memory_space<vmem>>) target_semaphore(%72 : memref<!tpu.dma_semaphore, #tpu.memory_space<semaphore_mem>>)
        %c8_i32_37 = arith.constant 8 : i32
        %73 = arith.muli %arg7, %c8_i32_37 : i32
        %c4_i32 = arith.constant 4 : i32
        %74 = arith.addi %73, %c4_i32 : i32
        %75 = arith.addi %29, %74 : i32
        %76 = arith.index_cast %75 : i32 to index
        %77 = memref.load %arg2[%76] : memref<16xi32, #tpu.memory_space<smem>>
        %78 = arith.addi %31, %74 : i32
        %c0_i32_38 = arith.constant 0 : i32
        %79 = tpu.memref_slice %arg3[%77, %c0_i32_38] : memref<64x32xf32, #tpu.memory_space<any>> -> memref<1x32xf32, #tpu.memory_space<any>>
        %c0_i32_39 = arith.constant 0 : i32
        %80 = tpu.memref_slice %arg5[%78, %c0_i32_39] : memref<32x32xf32, #tpu.memory_space<vmem>> -> memref<1x32xf32, #tpu.memory_space<vmem>>
        %81 = tpu.memref_slice %arg6[%28] : memref<2x!tpu.dma_semaphore, #tpu.memory_space<semaphore_mem>> -> memref<1x!tpu.dma_semaphore, #tpu.memory_space<semaphore_mem>>
        %82 = tpu.memref_squeeze %81 : memref<1x!tpu.dma_semaphore, #tpu.memory_space<semaphore_mem>> -> memref<!tpu.dma_semaphore, #tpu.memory_space<semaphore_mem>>
        tpu.enqueue_dma source(%79 : memref<1x32xf32, #tpu.memory_space<any>>) target(%80 : memref<1x32xf32, #tpu.memory_space<vmem>>) target_semaphore(%82 : memref<!tpu.dma_semaphore, #tpu.memory_space<semaphore_mem>>)
        %c8_i32_40 = arith.constant 8 : i32
        %83 = arith.muli %arg7, %c8_i32_40 : i32
        %c5_i32 = arith.constant 5 : i32
        %84 = arith.addi %83, %c5_i32 : i32
        %85 = arith.addi %29, %84 : i32
        %86 = arith.index_cast %85 : i32 to index
        %87 = memref.load %arg2[%86] : memref<16xi32, #tpu.memory_space<smem>>
        %88 = arith.addi %31, %84 : i32
        %c0_i32_41 = arith.constant 0 : i32
        %89 = tpu.memref_slice %arg3[%87, %c0_i32_41] : memref<64x32xf32, #tpu.memory_space<any>> -> memref<1x32xf32, #tpu.memory_space<any>>
        %c0_i32_42 = arith.constant 0 : i32
        %90 = tpu.memref_slice %arg5[%88, %c0_i32_42] : memref<32x32xf32, #tpu.memory_space<vmem>> -> memref<1x32xf32, #tpu.memory_space<vmem>>
        %91 = tpu.memref_slice %arg6[%28] : memref<2x!tpu.dma_semaphore, #tpu.memory_space<semaphore_mem>> -> memref<1x!tpu.dma_semaphore, #tpu.memory_space<semaphore_mem>>
        %92 = tpu.memref_squeeze %91 : memref<1x!tpu.dma_semaphore, #tpu.memory_space<semaphore_mem>> -> memref<!tpu.dma_semaphore, #tpu.memory_space<semaphore_mem>>
        tpu.enqueue_dma source(%89 : memref<1x32xf32, #tpu.memory_space<any>>) target(%90 : memref<1x32xf32, #tpu.memory_space<vmem>>) target_semaphore(%92 : memref<!tpu.dma_semaphore, #tpu.memory_space<semaphore_mem>>)
        %c8_i32_43 = arith.constant 8 : i32
        %93 = arith.muli %arg7, %c8_i32_43 : i32
        %c6_i32 = arith.constant 6 : i32
        %94 = arith.addi %93, %c6_i32 : i32
        %95 = arith.addi %29, %94 : i32
        %96 = arith.index_cast %95 : i32 to index
        %97 = memref.load %arg2[%96] : memref<16xi32, #tpu.memory_space<smem>>
        %98 = arith.addi %31, %94 : i32
        %c0_i32_44 = arith.constant 0 : i32
        %99 = tpu.memref_slice %arg3[%97, %c0_i32_44] : memref<64x32xf32, #tpu.memory_space<any>> -> memref<1x32xf32, #tpu.memory_space<any>>
        %c0_i32_45 = arith.constant 0 : i32
        %100 = tpu.memref_slice %arg5[%98, %c0_i32_45] : memref<32x32xf32, #tpu.memory_space<vmem>> -> memref<1x32xf32, #tpu.memory_space<vmem>>
        %101 = tpu.memref_slice %arg6[%28] : memref<2x!tpu.dma_semaphore, #tpu.memory_space<semaphore_mem>> -> memref<1x!tpu.dma_semaphore, #tpu.memory_space<semaphore_mem>>
        %102 = tpu.memref_squeeze %101 : memref<1x!tpu.dma_semaphore, #tpu.memory_space<semaphore_mem>> -> memref<!tpu.dma_semaphore, #tpu.memory_space<semaphore_mem>>
        tpu.enqueue_dma source(%99 : memref<1x32xf32, #tpu.memory_space<any>>) target(%100 : memref<1x32xf32, #tpu.memory_space<vmem>>) target_semaphore(%102 : memref<!tpu.dma_semaphore, #tpu.memory_space<semaphore_mem>>)
        %c8_i32_46 = arith.constant 8 : i32
        %103 = arith.muli %arg7, %c8_i32_46 : i32
        %c7_i32 = arith.constant 7 : i32
        %104 = arith.addi %103, %c7_i32 : i32
        %105 = arith.addi %29, %104 : i32
        %106 = arith.index_cast %105 : i32 to index
        %107 = memref.load %arg2[%106] : memref<16xi32, #tpu.memory_space<smem>>
        %108 = arith.addi %31, %104 : i32
        %c0_i32_47 = arith.constant 0 : i32
        %109 = tpu.memref_slice %arg3[%107, %c0_i32_47] : memref<64x32xf32, #tpu.memory_space<any>> -> memref<1x32xf32, #tpu.memory_space<any>>
        %c0_i32_48 = arith.constant 0 : i32
        %110 = tpu.memref_slice %arg5[%108, %c0_i32_48] : memref<32x32xf32, #tpu.memory_space<vmem>> -> memref<1x32xf32, #tpu.memory_space<vmem>>
        %111 = tpu.memref_slice %arg6[%28] : memref<2x!tpu.dma_semaphore, #tpu.memory_space<semaphore_mem>> -> memref<1x!tpu.dma_semaphore, #tpu.memory_space<semaphore_mem>>
        %112 = tpu.memref_squeeze %111 : memref<1x!tpu.dma_semaphore, #tpu.memory_space<semaphore_mem>> -> memref<!tpu.dma_semaphore, #tpu.memory_space<semaphore_mem>>
        tpu.enqueue_dma source(%109 : memref<1x32xf32, #tpu.memory_space<any>>) target(%110 : memref<1x32xf32, #tpu.memory_space<vmem>>) target_semaphore(%112 : memref<!tpu.dma_semaphore, #tpu.memory_space<semaphore_mem>>)
      }
      %c2_i32_22 = arith.constant 2 : i32
    } else {
    }
    %c16_i32 = arith.constant 16 : i32
    %19 = arith.muli %11, %c16_i32 : i32
    %20 = tpu.assume_multiple %19, 8 : i32
    %c0_i32_9 = arith.constant 0 : i32
    %c2_i32_10 = arith.constant 2 : i32
    %21 = arith.addi %c0_i32_9, %c2_i32_10 : i32
    %c1_i32_11 = arith.constant 1 : i32
    scf.for %arg7 = %c0_i32_9 to %21 step %c1_i32_11  : i32 {
      %c8_i32 = arith.constant 8 : i32
      %27 = arith.muli %arg7, %c8_i32 : i32
      %c0_i32_15 = arith.constant 0 : i32
      %28 = arith.addi %27, %c0_i32_15 : i32
      %29 = arith.addi %20, %28 : i32
      %c0_i32_16 = arith.constant 0 : i32
      %c0_i32_17 = arith.constant 0 : i32
      %30 = tpu.memref_slice %arg3[%c0_i32_16, %c0_i32_17] : memref<64x32xf32, #tpu.memory_space<any>> -> memref<1x32xf32, #tpu.memory_space<any>>
      %c0_i32_18 = arith.constant 0 : i32
      %31 = tpu.memref_slice %arg5[%29, %c0_i32_18] : memref<32x32xf32, #tpu.memory_space<vmem>> -> memref<1x32xf32, #tpu.memory_space<vmem>>
      %32 = tpu.memref_slice %arg6[%11] : memref<2x!tpu.dma_semaphore, #tpu.memory_space<semaphore_mem>> -> memref<1x!tpu.dma_semaphore, #tpu.memory_space<semaphore_mem>>
      %33 = tpu.memref_squeeze %32 : memref<1x!tpu.dma_semaphore, #tpu.memory_space<semaphore_mem>> -> memref<!tpu.dma_semaphore, #tpu.memory_space<semaphore_mem>>
      tpu.wait_dma2 semaphore(%33 : memref<!tpu.dma_semaphore, #tpu.memory_space<semaphore_mem>>) src(%30 : memref<1x32xf32, #tpu.memory_space<any>>) dst(%31 : memref<1x32xf32, #tpu.memory_space<vmem>>)
      %c8_i32_19 = arith.constant 8 : i32
      %34 = arith.muli %arg7, %c8_i32_19 : i32
      %c1_i32_20 = arith.constant 1 : i32
      %35 = arith.addi %34, %c1_i32_20 : i32
      %36 = arith.addi %20, %35 : i32
      %c0_i32_21 = arith.constant 0 : i32
      %c0_i32_22 = arith.constant 0 : i32
      %37 = tpu.memref_slice %arg3[%c0_i32_21, %c0_i32_22] : memref<64x32xf32, #tpu.memory_space<any>> -> memref<1x32xf32, #tpu.memory_space<any>>
      %c0_i32_23 = arith.constant 0 : i32
      %38 = tpu.memref_slice %arg5[%36, %c0_i32_23] : memref<32x32xf32, #tpu.memory_space<vmem>> -> memref<1x32xf32, #tpu.memory_space<vmem>>
      %39 = tpu.memref_slice %arg6[%11] : memref<2x!tpu.dma_semaphore, #tpu.memory_space<semaphore_mem>> -> memref<1x!tpu.dma_semaphore, #tpu.memory_space<semaphore_mem>>
      %40 = tpu.memref_squeeze %39 : memref<1x!tpu.dma_semaphore, #tpu.memory_space<semaphore_mem>> -> memref<!tpu.dma_semaphore, #tpu.memory_space<semaphore_mem>>
      tpu.wait_dma2 semaphore(%40 : memref<!tpu.dma_semaphore, #tpu.memory_space<semaphore_mem>>) src(%37 : memref<1x32xf32, #tpu.memory_space<any>>) dst(%38 : memref<1x32xf32, #tpu.memory_space<vmem>>)
      %c8_i32_24 = arith.constant 8 : i32
      %41 = arith.muli %arg7, %c8_i32_24 : i32
      %c2_i32_25 = arith.constant 2 : i32
      %42 = arith.addi %41, %c2_i32_25 : i32
      %43 = arith.addi %20, %42 : i32
      %c0_i32_26 = arith.constant 0 : i32
      %c0_i32_27 = arith.constant 0 : i32
      %44 = tpu.memref_slice %arg3[%c0_i32_26, %c0_i32_27] : memref<64x32xf32, #tpu.memory_space<any>> -> memref<1x32xf32, #tpu.memory_space<any>>
      %c0_i32_28 = arith.constant 0 : i32
      %45 = tpu.memref_slice %arg5[%43, %c0_i32_28] : memref<32x32xf32, #tpu.memory_space<vmem>> -> memref<1x32xf32, #tpu.memory_space<vmem>>
      %46 = tpu.memref_slice %arg6[%11] : memref<2x!tpu.dma_semaphore, #tpu.memory_space<semaphore_mem>> -> memref<1x!tpu.dma_semaphore, #tpu.memory_space<semaphore_mem>>
      %47 = tpu.memref_squeeze %46 : memref<1x!tpu.dma_semaphore, #tpu.memory_space<semaphore_mem>> -> memref<!tpu.dma_semaphore, #tpu.memory_space<semaphore_mem>>
      tpu.wait_dma2 semaphore(%47 : memref<!tpu.dma_semaphore, #tpu.memory_space<semaphore_mem>>) src(%44 : memref<1x32xf32, #tpu.memory_space<any>>) dst(%45 : memref<1x32xf32, #tpu.memory_space<vmem>>)
      %c8_i32_29 = arith.constant 8 : i32
      %48 = arith.muli %arg7, %c8_i32_29 : i32
      %c3_i32 = arith.constant 3 : i32
      %49 = arith.addi %48, %c3_i32 : i32
      %50 = arith.addi %20, %49 : i32
      %c0_i32_30 = arith.constant 0 : i32
      %c0_i32_31 = arith.constant 0 : i32
      %51 = tpu.memref_slice %arg3[%c0_i32_30, %c0_i32_31] : memref<64x32xf32, #tpu.memory_space<any>> -> memref<1x32xf32, #tpu.memory_space<any>>
      %c0_i32_32 = arith.constant 0 : i32
      %52 = tpu.memref_slice %arg5[%50, %c0_i32_32] : memref<32x32xf32, #tpu.memory_space<vmem>> -> memref<1x32xf32, #tpu.memory_space<vmem>>
      %53 = tpu.memref_slice %arg6[%11] : memref<2x!tpu.dma_semaphore, #tpu.memory_space<semaphore_mem>> -> memref<1x!tpu.dma_semaphore, #tpu.memory_space<semaphore_mem>>
      %54 = tpu.memref_squeeze %53 : memref<1x!tpu.dma_semaphore, #tpu.memory_space<semaphore_mem>> -> memref<!tpu.dma_semaphore, #tpu.memory_space<semaphore_mem>>
      tpu.wait_dma2 semaphore(%54 : memref<!tpu.dma_semaphore, #tpu.memory_space<semaphore_mem>>) src(%51 : memref<1x32xf32, #tpu.memory_space<any>>) dst(%52 : memref<1x32xf32, #tpu.memory_space<vmem>>)
      %c8_i32_33 = arith.constant 8 : i32
      %55 = arith.muli %arg7, %c8_i32_33 : i32
      %c4_i32 = arith.constant 4 : i32
      %56 = arith.addi %55, %c4_i32 : i32
      %57 = arith.addi %20, %56 : i32
      %c0_i32_34 = arith.constant 0 : i32
      %c0_i32_35 = arith.constant 0 : i32
      %58 = tpu.memref_slice %arg3[%c0_i32_34, %c0_i32_35] : memref<64x32xf32, #tpu.memory_space<any>> -> memref<1x32xf32, #tpu.memory_space<any>>
      %c0_i32_36 = arith.constant 0 : i32
      %59 = tpu.memref_slice %arg5[%57, %c0_i32_36] : memref<32x32xf32, #tpu.memory_space<vmem>> -> memref<1x32xf32, #tpu.memory_space<vmem>>
      %60 = tpu.memref_slice %arg6[%11] : memref<2x!tpu.dma_semaphore, #tpu.memory_space<semaphore_mem>> -> memref<1x!tpu.dma_semaphore, #tpu.memory_space<semaphore_mem>>
      %61 = tpu.memref_squeeze %60 : memref<1x!tpu.dma_semaphore, #tpu.memory_space<semaphore_mem>> -> memref<!tpu.dma_semaphore, #tpu.memory_space<semaphore_mem>>
      tpu.wait_dma2 semaphore(%61 : memref<!tpu.dma_semaphore, #tpu.memory_space<semaphore_mem>>) src(%58 : memref<1x32xf32, #tpu.memory_space<any>>) dst(%59 : memref<1x32xf32, #tpu.memory_space<vmem>>)
      %c8_i32_37 = arith.constant 8 : i32
      %62 = arith.muli %arg7, %c8_i32_37 : i32
      %c5_i32 = arith.constant 5 : i32
      %63 = arith.addi %62, %c5_i32 : i32
      %64 = arith.addi %20, %63 : i32
      %c0_i32_38 = arith.constant 0 : i32
      %c0_i32_39 = arith.constant 0 : i32
      %65 = tpu.memref_slice %arg3[%c0_i32_38, %c0_i32_39] : memref<64x32xf32, #tpu.memory_space<any>> -> memref<1x32xf32, #tpu.memory_space<any>>
      %c0_i32_40 = arith.constant 0 : i32
      %66 = tpu.memref_slice %arg5[%64, %c0_i32_40] : memref<32x32xf32, #tpu.memory_space<vmem>> -> memref<1x32xf32, #tpu.memory_space<vmem>>
      %67 = tpu.memref_slice %arg6[%11] : memref<2x!tpu.dma_semaphore, #tpu.memory_space<semaphore_mem>> -> memref<1x!tpu.dma_semaphore, #tpu.memory_space<semaphore_mem>>
      %68 = tpu.memref_squeeze %67 : memref<1x!tpu.dma_semaphore, #tpu.memory_space<semaphore_mem>> -> memref<!tpu.dma_semaphore, #tpu.memory_space<semaphore_mem>>
      tpu.wait_dma2 semaphore(%68 : memref<!tpu.dma_semaphore, #tpu.memory_space<semaphore_mem>>) src(%65 : memref<1x32xf32, #tpu.memory_space<any>>) dst(%66 : memref<1x32xf32, #tpu.memory_space<vmem>>)
      %c8_i32_41 = arith.constant 8 : i32
      %69 = arith.muli %arg7, %c8_i32_41 : i32
      %c6_i32 = arith.constant 6 : i32
      %70 = arith.addi %69, %c6_i32 : i32
      %71 = arith.addi %20, %70 : i32
      %c0_i32_42 = arith.constant 0 : i32
      %c0_i32_43 = arith.constant 0 : i32
      %72 = tpu.memref_slice %arg3[%c0_i32_42, %c0_i32_43] : memref<64x32xf32, #tpu.memory_space<any>> -> memref<1x32xf32, #tpu.memory_space<any>>
      %c0_i32_44 = arith.constant 0 : i32
      %73 = tpu.memref_slice %arg5[%71, %c0_i32_44] : memref<32x32xf32, #tpu.memory_space<vmem>> -> memref<1x32xf32, #tpu.memory_space<vmem>>
      %74 = tpu.memref_slice %arg6[%11] : memref<2x!tpu.dma_semaphore, #tpu.memory_space<semaphore_mem>> -> memref<1x!tpu.dma_semaphore, #tpu.memory_space<semaphore_mem>>
      %75 = tpu.memref_squeeze %74 : memref<1x!tpu.dma_semaphore, #tpu.memory_space<semaphore_mem>> -> memref<!tpu.dma_semaphore, #tpu.memory_space<semaphore_mem>>
      tpu.wait_dma2 semaphore(%75 : memref<!tpu.dma_semaphore, #tpu.memory_space<semaphore_mem>>) src(%72 : memref<1x32xf32, #tpu.memory_space<any>>) dst(%73 : memref<1x32xf32, #tpu.memory_space<vmem>>)
      %c8_i32_45 = arith.constant 8 : i32
      %76 = arith.muli %arg7, %c8_i32_45 : i32
      %c7_i32 = arith.constant 7 : i32
      %77 = arith.addi %76, %c7_i32 : i32
      %78 = arith.addi %20, %77 : i32
      %c0_i32_46 = arith.constant 0 : i32
      %c0_i32_47 = arith.constant 0 : i32
      %79 = tpu.memref_slice %arg3[%c0_i32_46, %c0_i32_47] : memref<64x32xf32, #tpu.memory_space<any>> -> memref<1x32xf32, #tpu.memory_space<any>>
      %c0_i32_48 = arith.constant 0 : i32
      %80 = tpu.memref_slice %arg5[%78, %c0_i32_48] : memref<32x32xf32, #tpu.memory_space<vmem>> -> memref<1x32xf32, #tpu.memory_space<vmem>>
      %81 = tpu.memref_slice %arg6[%11] : memref<2x!tpu.dma_semaphore, #tpu.memory_space<semaphore_mem>> -> memref<1x!tpu.dma_semaphore, #tpu.memory_space<semaphore_mem>>
      %82 = tpu.memref_squeeze %81 : memref<1x!tpu.dma_semaphore, #tpu.memory_space<semaphore_mem>> -> memref<!tpu.dma_semaphore, #tpu.memory_space<semaphore_mem>>
      tpu.wait_dma2 semaphore(%82 : memref<!tpu.dma_semaphore, #tpu.memory_space<semaphore_mem>>) src(%79 : memref<1x32xf32, #tpu.memory_space<any>>) dst(%80 : memref<1x32xf32, #tpu.memory_space<vmem>>)
    }
    %c2_i32_12 = arith.constant 2 : i32
    %22 = arith.index_cast %20 : i32 to index
    %c0 = arith.constant 0 : index
    %23 = vector.load %arg5[%22, %c0] : memref<32x32xf32, #tpu.memory_space<vmem>>, vector<16x32xf32>
    %cst = arith.constant 5.65685415 : f32
    %24 = vector.broadcast %cst : f32 to vector<16x32xf32>
    %25 = arith.mulf %23, %24 : vector<16x32xf32>
    %c0_13 = arith.constant 0 : index
    %c0_14 = arith.constant 0 : index
    %26 = vector.load %arg4[%c0_13, %c0_14] : memref<16x32xf32, #tpu.memory_space<vmem>>, vector<16x32xf32>
    tpu.vector_store %arg4[%c0_13, %c0_14], %25 {strides = array<i32>} : memref<16x32xf32, #tpu.memory_space<vmem>>, vector<16x32xf32>,
    return
  }
  func.func @transform_1(%arg0: i32, %arg1: i32, %arg2: memref<16xi32, #tpu.memory_space<smem>>) -> (i32, i32) {
    %c1_i32 = arith.constant 1 : i32
    %0 = arith.muli %arg0, %c1_i32 : i32
    %1 = arith.addi %0, %arg1 : i32
    %c0_i32 = arith.constant 0 : i32
    %c0_i32_0 = arith.constant 0 : i32
    return %1, %c0_i32 : i32, i32
  }
}

</mosaic_0001>

<llo_original>
// kernel: tpu_custom_call.1
$region0: #{tpu_custom_call.1}
  #allocation0 [shape = 'u32[]', space=smem, size = 0x4, offset = 0x4, fixed_abs, tag = 'smem constant byte address 0x4 - core index']
  #allocation1 [shape = 'u32[144,128]{1,0:T(1,128)}', space=vmem, size = 0x12000, scoped, tag = 'internal scratch']
  #allocation2 [shape = 'f32[32,32]{1,0:T(8,128)}', space=vmem, size = 0x4000, scoped, tag = 'scratch operand']
  #allocation3 [shape = 's32[2]{0}', space=sflag, size = 0x8, scoped, tag = 'scratch operand']
  #allocation4 [shape = 's32[1]{0}', space=sflag, size = 0x4, scoped, tag = 'scoped memory for tpu_custom_call.1']
  #allocation5 [shape = 'u8[512]{0}', space=smem, size = 0x200, scoped, tag = 'prefetched SMEM operand 0']
  #allocation8 [shape = 's32[]', space=sflag, size = 0x4, offset = 0, fixed_abs, tag = 'sflag constant byte address 0x0 - dummy sync flag']
  #allocation9 [shape = 's32[]', space=sflag, size = 0x4, offset = 0, fixed_abs, tag = 'sflag constant byte address 0x0 - dummy sync flag']
  #allocation10 [shape = 's32[]', space=sflag, size = 0x4, offset = 0, fixed_abs, tag = 'sflag constant byte address 0x0 - dummy sync flag']
  #allocation11 [shape = 's32[]', space=sflag, size = 0x4, offset = 0, fixed_abs, tag = 'sflag constant byte address 0x0 - dummy sync flag']
  #allocation12 [shape = 's32[]', space=sflag, size = 0x4, offset = 0, fixed_abs, tag = 'sflag constant byte address 0x0 - dummy sync flag']
  #allocation13 [shape = 's32[]', space=sflag, size = 0x4, offset = 0, fixed_abs, tag = 'sflag constant byte address 0x0 - dummy sync flag']
  #allocation14 [shape = 's32[]', space=sflag, size = 0x4, offset = 0, fixed_abs, tag = 'sflag constant byte address 0x0 - dummy sync flag']
  #allocation15 [shape = 's32[]', space=sflag, size = 0x4, offset = 0, fixed_abs, tag = 'sflag constant byte address 0x0 - dummy sync flag']
  #allocation16 [shape = 's32[]', space=sflag, size = 0x4, offset = 0, fixed_abs, tag = 'sflag constant byte address 0x0 - dummy sync flag']
  #allocation17 [shape = 's32[]', space=sflag, size = 0x4, offset = 0, fixed_abs, tag = 'sflag constant byte address 0x0 - dummy sync flag']
  #allocation18 [shape = 's32[]', space=sflag, size = 0x4, offset = 0, fixed_abs, tag = 'sflag constant byte address 0x0 - dummy sync flag']
  #allocation19 [shape = 's32[]', space=sflag, size = 0x4, offset = 0, fixed_abs, tag = 'sflag constant byte address 0x0 - dummy sync flag']
  #allocation20 [shape = 's32[]', space=sflag, size = 0x4, offset = 0, fixed_abs, tag = 'sflag constant byte address 0x0 - dummy sync flag']
  #allocation21 [shape = 's32[]', space=sflag, size = 0x4, offset = 0, fixed_abs, tag = 'sflag constant byte address 0x0 - dummy sync flag']
  #allocation22 [shape = 's32[]', space=sflag, size = 0x4, offset = 0, fixed_abs, tag = 'sflag constant byte address 0x0 - dummy sync flag']
  #allocation23 [shape = 's32[]', space=sflag, size = 0x4, offset = 0, fixed_abs, tag = 'sflag constant byte address 0x0 - dummy sync flag']
  %s0 = inlined_call_operand.vmem [shape: s32[16], index: 0, kind: input, shape index: {}]
  %s1 = inlined_call_operand.vmem [shape: f32[64,32], index: 1, kind: input, shape index: {}]
  %s2 = inlined_call_operand.hbm [shape: f32[16,32], index: 2, kind: output, shape index: {}]
  %s3 = sld [smem:[#allocation0]]
  $region519: #{tpu_custom_call.1} parent=0
    _
  %s5 = ssub.s32 1, %s3
  %s6 = scalar_select 0, %s5, %s3
  %s7 = sshll.u32 %s0, 4
  %s8 = int_to_ptr.vmem [resolvable:$true] %s7
  %10 = dma.vmem_to_smem %s8, 16, [#allocation5], [#allocation4]
  %11 = dma.done [#allocation4], 16
  %12 = sfence
  $region1: #{tpu_custom_call.1} parent=0
    #allocation6 [shape = 'u8[8192]{0}', space=vmem, size = 0x2000, scoped, tag = 'output window, operand 0, single buffered']
    #allocation7 [shape = 's32[1]{0}', space=sflag, size = 0x4, scoped, tag = 'scoped memory for tpu_custom_call.1']
    %13 = vsyncpa [#allocation7], 0
    %s14 = sadd.s32 0, 0
    %s15 = smul.u32 2, %s14
    %s16 = sadd.s32 0, 0
    %s17 = ssub.s32 0, 0
    %s18 = ssub.s32 0, 0
    %p19 = scmp.ne.s32.totalorder 0, 0
    %p20 = scmp.lt.s32.totalorder 0, 0
    %p21 = pnand %p20, %p19
    %p22 = pneg %p21
    %s23 = sadd.s32 0, 2
    %s24 = scalar_select %p22, %s23, 0
    %p25 = scmp.eq.s32.totalorder 0, 0
    // Predicated region
    $region2: #{tpu_custom_call.1} parent=1 // pred_check
      %p26 = pneg %p25
    $region3: #{tpu_custom_call.1} parent=1 // pred_check_branch
      %28 = sbr.rel (%p26) target = $region5
    $region4: #{tpu_custom_call.1} parent=1 // pred_region
      %s29 = smul.u32 %s16, 16
      %s30 = smul.u32 %s24, 16
      loop: start=0, step=1, limit=2
      $region6: #{tpu_custom_call.1} parent=4 // loop_pre_header
        _
      $region7: #{tpu_custom_call.1} parent=4 // loop_header
        %s32 = sphi 0, %s36
        %p33 = scmp.ge.s32.totalorder %s32, 2
      $region8: #{tpu_custom_call.1} parent=4 // loop_header_branch
        %35 = sbr.rel (%p33) target = $region12
      $region9: #{tpu_custom_call.1} parent=4 // loop_body
        %s37 = smul.u32 %s32, 8
        %s38 = sadd.s32 %s29, %s37
        %s39 = sld [smem:[#allocation5 + %s38]]
        %s40 = sadd.s32 %s30, %s37
        %s41 = scalar_lea.vmem %s1, %s39
        %s42 = scalar_lea.vmem [#allocation2], %s40
        %s43 = scalar_lea.sflag [#allocation3], %s24
        %p45 = scmp.lt.u32.totalorder 1, 8
        %p46 = pneg %p45
        // Predicated region
        $region13: #{tpu_custom_call.1} parent=9 // pred_check
          _
        $region14: #{tpu_custom_call.1} parent=9 // pred_check_branch
          %48 = sbr.rel (%p45) target = $region16
        $region15: #{tpu_custom_call.1} parent=9 // pred_region
          %s64 = sand.u32 1, 7
          %p65 = scmp.eq.s32.totalorder %s64, 0
          %p66 = pneg %p65
          // Predicated region
          $region28: #{tpu_custom_call.1} parent=15 // pred_check
            _
          $region29: #{tpu_custom_call.1} parent=15 // pred_check_branch
            %68 = sbr.rel (%p65) target = $region31
          $region30: #{tpu_custom_call.1} parent=15 // pred_region
            %s69 = sand.u32 1, 7
            %s70 = ssub.s32 1, %s69
            %s71 = scalar_lea.vmem %s41, %s70
            %s72 = ssub.s32 1, %s69
            %s73 = scalar_lea.vmem %s42, %s72 [#allocation2]
            %s74 = sshll.u32 1, %s69
            %s75 = ssub.s32 %s74, 1
            loop: start=0, step=1, limit=1
            $region32: #{tpu_custom_call.1} parent=30 // loop_pre_header
              _
            $region33: #{tpu_custom_call.1} parent=30 // loop_header
              %s77 = sphi 0, %s81
              %p78 = scmp.ge.s32.totalorder %s77, 1
              %s82 = sphi %s71, %s71
              %s83 = sphi %s73, %s73
            $region34: #{tpu_custom_call.1} parent=30 // loop_header_branch
              %80 = sbr.rel (%p78) target = $region38
            $region35: #{tpu_custom_call.1} parent=30 // loop_body
              %v84 = vld [vmem:[%s82] sm:%s75]
              %85 = vst [vmem:[%s83] sm:%s75] %v84
            $region36: #{tpu_custom_call.1} parent=30 // loop_footer
              %s81 = sadd.s32 1, %s77
            $region37: #{tpu_custom_call.1} parent=30 // loop_footer_branch
              %76 = sbr.rel target = $region33
            $region38: #{tpu_custom_call.1} parent=30 // loop_exit
              _
          $region31: #{tpu_custom_call.1} parent=15 // pred_fallthru
            _
        $region16: #{tpu_custom_call.1} parent=9 // pred_fallthru
          _
        // Predicated region
        $region17: #{tpu_custom_call.1} parent=9 // pred_check
          %p49 = pneg %p45
        $region18: #{tpu_custom_call.1} parent=9 // pred_check_branch
          %51 = sbr.rel (%p49) target = $region20
        $region19: #{tpu_custom_call.1} parent=9 // pred_region
          %s52 = sshll.u32 1, 1
          %s53 = ssub.s32 %s52, 1
          loop: start=0, step=1, limit=1
          $region21: #{tpu_custom_call.1} parent=19 // loop_pre_header
            _
          $region22: #{tpu_custom_call.1} parent=19 // loop_header
            %s55 = sphi 0, %s59
            %p56 = scmp.ge.s32.totalorder %s55, 1
            %s60 = sphi %s41, %s41
            %s61 = sphi %s42, %s42
          $region23: #{tpu_custom_call.1} parent=19 // loop_header_branch
            %58 = sbr.rel (%p56) target = $region27
          $region24: #{tpu_custom_call.1} parent=19 // loop_body
            %v62 = vld [vmem:[%s60] sm:%s53]
            %63 = vst [vmem:[%s61] sm:%s53] %v62
          $region25: #{tpu_custom_call.1} parent=19 // loop_footer
            %s59 = sadd.s32 1, %s55
          $region26: #{tpu_custom_call.1} parent=19 // loop_footer_branch
            %54 = sbr.rel target = $region22
          $region27: #{tpu_custom_call.1} parent=19 // loop_exit
            _
        $region20: #{tpu_custom_call.1} parent=9 // pred_fallthru
          _
        // Predicated region
        $region39: #{tpu_custom_call.1} parent=9 // pred_check
          _
        $region40: #{tpu_custom_call.1} parent=9 // pred_check_branch
          %88 = sbr.rel (0) target = $region42
        $region41: #{tpu_custom_call.1} parent=9 // pred_region
          %89 = vsyncadd %s43, 16
        $region42: #{tpu_custom_call.1} parent=9 // pred_fallthru
          _
        %s90 = sadd.s32 %s37, 1
        %s91 = sadd.s32 %s29, %s90
        %s92 = sld [smem:[#allocation5 + %s91]]
        %s93 = sadd.s32 %s30, %s90
        %s94 = scalar_lea.vmem %s1, %s92
        %s95 = scalar_lea.vmem [#allocation2], %s93
        %p97 = scmp.lt.u32.totalorder 1, 8
        %p98 = pneg %p97
        // Predicated region
        $region43: #{tpu_custom_call.1} parent=9 // pred_check
          _
        $region44: #{tpu_custom_call.1} parent=9 // pred_check_branch
          %100 = sbr.rel (%p97) target = $region46
        $region45: #{tpu_custom_call.1} parent=9 // pred_region
          %s116 = sand.u32 1, 7
          %p117 = scmp.eq.s32.totalorder %s116, 0
          %p118 = pneg %p117
          // Predicated region
          $region58: #{tpu_custom_call.1} parent=45 // pred_check
            _
          $region59: #{tpu_custom_call.1} parent=45 // pred_check_branch
            %120 = sbr.rel (%p117) target = $region61
          $region60: #{tpu_custom_call.1} parent=45 // pred_region
            %s121 = sand.u32 1, 7
            %s122 = ssub.s32 1, %s121
            %s123 = scalar_lea.vmem %s94, %s122
            %s124 = ssub.s32 1, %s121
            %s125 = scalar_lea.vmem %s95, %s124 [#allocation2]
            %s126 = sshll.u32 1, %s121
            %s127 = ssub.s32 %s126, 1
            loop: start=0, step=1, limit=1
            $region62: #{tpu_custom_call.1} parent=60 // loop_pre_header
              _
            $region63: #{tpu_custom_call.1} parent=60 // loop_header
              %s129 = sphi 0, %s133
              %p130 = scmp.ge.s32.totalorder %s129, 1
              %s134 = sphi %s123, %s123
              %s135 = sphi %s125, %s125
            $region64: #{tpu_custom_call.1} parent=60 // loop_header_branch
              %132 = sbr.rel (%p130) target = $region68
            $region65: #{tpu_custom_call.1} parent=60 // loop_body
              %v136 = vld [vmem:[%s134] sm:%s127]
              %137 = vst [vmem:[%s135] sm:%s127] %v136
            $region66: #{tpu_custom_call.1} parent=60 // loop_footer
              %s133 = sadd.s32 1, %s129
            $region67: #{tpu_custom_call.1} parent=60 // loop_footer_branch
              %128 = sbr.rel target = $region63
            $region68: #{tpu_custom_call.1} parent=60 // loop_exit
              _
          $region61: #{tpu_custom_call.1} parent=45 // pred_fallthru
            _
        $region46: #{tpu_custom_call.1} parent=9 // pred_fallthru
          _
        // Predicated region
        $region47: #{tpu_custom_call.1} parent=9 // pred_check
          %p101 = pneg %p97
        $region48: #{tpu_custom_call.1} parent=9 // pred_check_branch
          %103 = sbr.rel (%p101) target = $region50
        $region49: #{tpu_custom_call.1} parent=9 // pred_region
          %s104 = sshll.u32 1, 1
          %s105 = ssub.s32 %s104, 1
          loop: start=0, step=1, limit=1
          $region51: #{tpu_custom_call.1} parent=49 // loop_pre_header
            _
          $region52: #{tpu_custom_call.1} parent=49 // loop_header
            %s107 = sphi 0, %s111
            %p108 = scmp.ge.s32.totalorder %s107, 1
            %s112 = sphi %s94, %s94
            %s113 = sphi %s95, %s95
          $region53: #{tpu_custom_call.1} parent=49 // loop_header_branch
            %110 = sbr.rel (%p108) target = $region57
          $region54: #{tpu_custom_call.1} parent=49 // loop_body
            %v114 = vld [vmem:[%s112] sm:%s105]
            %115 = vst [vmem:[%s113] sm:%s105] %v114
          $region55: #{tpu_custom_call.1} parent=49 // loop_footer
            %s111 = sadd.s32 1, %s107
          $region56: #{tpu_custom_call.1} parent=49 // loop_footer_branch
            %106 = sbr.rel target = $region52
          $region57: #{tpu_custom_call.1} parent=49 // loop_exit
            _
        $region50: #{tpu_custom_call.1} parent=9 // pred_fallthru
          _
        // Predicated region
        $region69: #{tpu_custom_call.1} parent=9 // pred_check
          _
        $region70: #{tpu_custom_call.1} parent=9 // pred_check_branch
          %140 = sbr.rel (0) target = $region72
        $region71: #{tpu_custom_call.1} parent=9 // pred_region
          %141 = vsyncadd %s43, 16
        $region72: #{tpu_custom_call.1} parent=9 // pred_fallthru
          _
        %s142 = sadd.s32 %s37, 2
        %s143 = sadd.s32 %s29, %s142
        %s144 = sld [smem:[#allocation5 + %s143]]
        %s145 = sadd.s32 %s30, %s142
        %s146 = scalar_lea.vmem %s1, %s144
        %s147 = scalar_lea.vmem [#allocation2], %s145
        %p149 = scmp.lt.u32.totalorder 1, 8
        %p150 = pneg %p149
        // Predicated region
        $region73: #{tpu_custom_call.1} parent=9 // pred_check
          _
        $region74: #{tpu_custom_call.1} parent=9 // pred_check_branch
          %152 = sbr.rel (%p149) target = $region76
        $region75: #{tpu_custom_call.1} parent=9 // pred_region
          %s168 = sand.u32 1, 7
          %p169 = scmp.eq.s32.totalorder %s168, 0
          %p170 = pneg %p169
          // Predicated region
          $region88: #{tpu_custom_call.1} parent=75 // pred_check
            _
          $region89: #{tpu_custom_call.1} parent=75 // pred_check_branch
            %172 = sbr.rel (%p169) target = $region91
          $region90: #{tpu_custom_call.1} parent=75 // pred_region
            %s173 = sand.u32 1, 7
            %s174 = ssub.s32 1, %s173
            %s175 = scalar_lea.vmem %s146, %s174
            %s176 = ssub.s32 1, %s173
            %s177 = scalar_lea.vmem %s147, %s176 [#allocation2]
            %s178 = sshll.u32 1, %s173
            %s179 = ssub.s32 %s178, 1
            loop: start=0, step=1, limit=1
            $region92: #{tpu_custom_call.1} parent=90 // loop_pre_header
              _
            $region93: #{tpu_custom_call.1} parent=90 // loop_header
              %s181 = sphi 0, %s185
              %p182 = scmp.ge.s32.totalorder %s181, 1
              %s186 = sphi %s175, %s175
              %s187 = sphi %s177, %s177
            $region94: #{tpu_custom_call.1} parent=90 // loop_header_branch
              %184 = sbr.rel (%p182) target = $region98
            $region95: #{tpu_custom_call.1} parent=90 // loop_body
              %v188 = vld [vmem:[%s186] sm:%s179]
              %189 = vst [vmem:[%s187] sm:%s179] %v188
            $region96: #{tpu_custom_call.1} parent=90 // loop_footer
              %s185 = sadd.s32 1, %s181
            $region97: #{tpu_custom_call.1} parent=90 // loop_footer_branch
              %180 = sbr.rel target = $region93
            $region98: #{tpu_custom_call.1} parent=90 // loop_exit
              _
          $region91: #{tpu_custom_call.1} parent=75 // pred_fallthru
            _
        $region76: #{tpu_custom_call.1} parent=9 // pred_fallthru
          _
        // Predicated region
        $region77: #{tpu_custom_call.1} parent=9 // pred_check
          %p153 = pneg %p149
        $region78: #{tpu_custom_call.1} parent=9 // pred_check_branch
          %155 = sbr.rel (%p153) target = $region80
        $region79: #{tpu_custom_call.1} parent=9 // pred_region
          %s156 = sshll.u32 1, 1
          %s157 = ssub.s32 %s156, 1
          loop: start=0, step=1, limit=1
          $region81: #{tpu_custom_call.1} parent=79 // loop_pre_header
            _
          $region82: #{tpu_custom_call.1} parent=79 // loop_header
            %s159 = sphi 0, %s163
            %p160 = scmp.ge.s32.totalorder %s159, 1
            %s164 = sphi %s146, %s146
            %s165 = sphi %s147, %s147
          $region83: #{tpu_custom_call.1} parent=79 // loop_header_branch
            %162 = sbr.rel (%p160) target = $region87
          $region84: #{tpu_custom_call.1} parent=79 // loop_body
            %v166 = vld [vmem:[%s164] sm:%s157]
            %167 = vst [vmem:[%s165] sm:%s157] %v166
          $region85: #{tpu_custom_call.1} parent=79 // loop_footer
            %s163 = sadd.s32 1, %s159
          $region86: #{tpu_custom_call.1} parent=79 // loop_footer_branch
            %158 = sbr.rel target = $region82
          $region87: #{tpu_custom_call.1} parent=79 // loop_exit
            _
        $region80: #{tpu_custom_call.1} parent=9 // pred_fallthru
          _
        // Predicated region
        $region99: #{tpu_custom_call.1} parent=9 // pred_check
          _
        $region100: #{tpu_custom_call.1} parent=9 // pred_check_branch
          %192 = sbr.rel (0) target = $region102
        $region101: #{tpu_custom_call.1} parent=9 // pred_region
          %193 = vsyncadd %s43, 16
        $region102: #{tpu_custom_call.1} parent=9 // pred_fallthru
          _
        %s194 = sadd.s32 %s37, 3
        %s195 = sadd.s32 %s29, %s194
        %s196 = sld [smem:[#allocation5 + %s195]]
        %s197 = sadd.s32 %s30, %s194
        %s198 = scalar_lea.vmem %s1, %s196
        %s199 = scalar_lea.vmem [#allocation2], %s197
        %p201 = scmp.lt.u32.totalorder 1, 8
        %p202 = pneg %p201
        // Predicated region
        $region103: #{tpu_custom_call.1} parent=9 // pred_check
          _
        $region104: #{tpu_custom_call.1} parent=9 // pred_check_branch
          %204 = sbr.rel (%p201) target = $region106
        $region105: #{tpu_custom_call.1} parent=9 // pred_region
          %s220 = sand.u32 1, 7
          %p221 = scmp.eq.s32.totalorder %s220, 0
          %p222 = pneg %p221
          // Predicated region
          $region118: #{tpu_custom_call.1} parent=105 // pred_check
            _
          $region119: #{tpu_custom_call.1} parent=105 // pred_check_branch
            %224 = sbr.rel (%p221) target = $region121
          $region120: #{tpu_custom_call.1} parent=105 // pred_region
            %s225 = sand.u32 1, 7
            %s226 = ssub.s32 1, %s225
            %s227 = scalar_lea.vmem %s198, %s226
            %s228 = ssub.s32 1, %s225
            %s229 = scalar_lea.vmem %s199, %s228 [#allocation2]
            %s230 = sshll.u32 1, %s225
            %s231 = ssub.s32 %s230, 1
            loop: start=0, step=1, limit=1
            $region122: #{tpu_custom_call.1} parent=120 // loop_pre_header
              _
            $region123: #{tpu_custom_call.1} parent=120 // loop_header
              %s233 = sphi 0, %s237
              %p234 = scmp.ge.s32.totalorder %s233, 1
              %s238 = sphi %s227, %s227
              %s239 = sphi %s229, %s229
            $region124: #{tpu_custom_call.1} parent=120 // loop_header_branch
              %236 = sbr.rel (%p234) target = $region128
            $region125: #{tpu_custom_call.1} parent=120 // loop_body
              %v240 = vld [vmem:[%s238] sm:%s231]
              %241 = vst [vmem:[%s239] sm:%s231] %v240
            $region126: #{tpu_custom_call.1} parent=120 // loop_footer
              %s237 = sadd.s32 1, %s233
            $region127: #{tpu_custom_call.1} parent=120 // loop_footer_branch
              %232 = sbr.rel target = $region123
            $region128: #{tpu_custom_call.1} parent=120 // loop_exit
              _
          $region121: #{tpu_custom_call.1} parent=105 // pred_fallthru
            _
        $region106: #{tpu_custom_call.1} parent=9 // pred_fallthru
          _
        // Predicated region
        $region107: #{tpu_custom_call.1} parent=9 // pred_check
          %p205 = pneg %p201
        $region108: #{tpu_custom_call.1} parent=9 // pred_check_branch
          %207 = sbr.rel (%p205) target = $region110
        $region109: #{tpu_custom_call.1} parent=9 // pred_region
          %s208 = sshll.u32 1, 1
          %s209 = ssub.s32 %s208, 1
          loop: start=0, step=1, limit=1
          $region111: #{tpu_custom_call.1} parent=109 // loop_pre_header
            _
          $region112: #{tpu_custom_call.1} parent=109 // loop_header
            %s211 = sphi 0, %s215
            %p212 = scmp.ge.s32.totalorder %s211, 1
            %s216 = sphi %s198, %s198
            %s217 = sphi %s199, %s199
          $region113: #{tpu_custom_call.1} parent=109 // loop_header_branch
            %214 = sbr.rel (%p212) target = $region117
          $region114: #{tpu_custom_call.1} parent=109 // loop_body
            %v218 = vld [vmem:[%s216] sm:%s209]
            %219 = vst [vmem:[%s217] sm:%s209] %v218
          $region115: #{tpu_custom_call.1} parent=109 // loop_footer
            %s215 = sadd.s32 1, %s211
          $region116: #{tpu_custom_call.1} parent=109 // loop_footer_branch
            %210 = sbr.rel target = $region112
          $region117: #{tpu_custom_call.1} parent=109 // loop_exit
            _
        $region110: #{tpu_custom_call.1} parent=9 // pred_fallthru
          _
        // Predicated region
        $region129: #{tpu_custom_call.1} parent=9 // pred_check
          _
        $region130: #{tpu_custom_call.1} parent=9 // pred_check_branch
          %244 = sbr.rel (0) target = $region132
        $region131: #{tpu_custom_call.1} parent=9 // pred_region
          %245 = vsyncadd %s43, 16
        $region132: #{tpu_custom_call.1} parent=9 // pred_fallthru
          _
        %s246 = sadd.s32 %s37, 4
        %s247 = sadd.s32 %s29, %s246
        %s248 = sld [smem:[#allocation5 + %s247]]
        %s249 = sadd.s32 %s30, %s246
        %s250 = scalar_lea.vmem %s1, %s248
        %s251 = scalar_lea.vmem [#allocation2], %s249
        %p253 = scmp.lt.u32.totalorder 1, 8
        %p254 = pneg %p253
        // Predicated region
        $region133: #{tpu_custom_call.1} parent=9 // pred_check
          _
        $region134: #{tpu_custom_call.1} parent=9 // pred_check_branch
          %256 = sbr.rel (%p253) target = $region136
        $region135: #{tpu_custom_call.1} parent=9 // pred_region
          %s272 = sand.u32 1, 7
          %p273 = scmp.eq.s32.totalorder %s272, 0
          %p274 = pneg %p273
          // Predicated region
          $region148: #{tpu_custom_call.1} parent=135 // pred_check
            _
          $region149: #{tpu_custom_call.1} parent=135 // pred_check_branch
            %276 = sbr.rel (%p273) target = $region151
          $region150: #{tpu_custom_call.1} parent=135 // pred_region
            %s277 = sand.u32 1, 7
            %s278 = ssub.s32 1, %s277
            %s279 = scalar_lea.vmem %s250, %s278
            %s280 = ssub.s32 1, %s277
            %s281 = scalar_lea.vmem %s251, %s280 [#allocation2]
            %s282 = sshll.u32 1, %s277
            %s283 = ssub.s32 %s282, 1
            loop: start=0, step=1, limit=1
            $region152: #{tpu_custom_call.1} parent=150 // loop_pre_header
              _
            $region153: #{tpu_custom_call.1} parent=150 // loop_header
              %s285 = sphi 0, %s289
              %p286 = scmp.ge.s32.totalorder %s285, 1
              %s290 = sphi %s279, %s279
              %s291 = sphi %s281, %s281
            $region154: #{tpu_custom_call.1} parent=150 // loop_header_branch
              %288 = sbr.rel (%p286) target = $region158
            $region155: #{tpu_custom_call.1} parent=150 // loop_body
              %v292 = vld [vmem:[%s290] sm:%s283]
              %293 = vst [vmem:[%s291] sm:%s283] %v292
            $region156: #{tpu_custom_call.1} parent=150 // loop_footer
              %s289 = sadd.s32 1, %s285
            $region157: #{tpu_custom_call.1} parent=150 // loop_footer_branch
              %284 = sbr.rel target = $region153
            $region158: #{tpu_custom_call.1} parent=150 // loop_exit
              _
          $region151: #{tpu_custom_call.1} parent=135 // pred_fallthru
            _
        $region136: #{tpu_custom_call.1} parent=9 // pred_fallthru
          _
        // Predicated region
        $region137: #{tpu_custom_call.1} parent=9 // pred_check
          %p257 = pneg %p253
        $region138: #{tpu_custom_call.1} parent=9 // pred_check_branch
          %259 = sbr.rel (%p257) target = $region140
        $region139: #{tpu_custom_call.1} parent=9 // pred_region
          %s260 = sshll.u32 1, 1
          %s261 = ssub.s32 %s260, 1
          loop: start=0, step=1, limit=1
          $region141: #{tpu_custom_call.1} parent=139 // loop_pre_header
            _
          $region142: #{tpu_custom_call.1} parent=139 // loop_header
            %s263 = sphi 0, %s267
            %p264 = scmp.ge.s32.totalorder %s263, 1
            %s268 = sphi %s250, %s250
            %s269 = sphi %s251, %s251
          $region143: #{tpu_custom_call.1} parent=139 // loop_header_branch
            %266 = sbr.rel (%p264) target = $region147
          $region144: #{tpu_custom_call.1} parent=139 // loop_body
            %v270 = vld [vmem:[%s268] sm:%s261]
            %271 = vst [vmem:[%s269] sm:%s261] %v270
          $region145: #{tpu_custom_call.1} parent=139 // loop_footer
            %s267 = sadd.s32 1, %s263
          $region146: #{tpu_custom_call.1} parent=139 // loop_footer_branch
            %262 = sbr.rel target = $region142
          $region147: #{tpu_custom_call.1} parent=139 // loop_exit
            _
        $region140: #{tpu_custom_call.1} parent=9 // pred_fallthru
          _
        // Predicated region
        $region159: #{tpu_custom_call.1} parent=9 // pred_check
          _
        $region160: #{tpu_custom_call.1} parent=9 // pred_check_branch
          %296 = sbr.rel (0) target = $region162
        $region161: #{tpu_custom_call.1} parent=9 // pred_region
          %297 = vsyncadd %s43, 16
        $region162: #{tpu_custom_call.1} parent=9 // pred_fallthru
          _
        %s298 = sadd.s32 %s37, 5
        %s299 = sadd.s32 %s29, %s298
        %s300 = sld [smem:[#allocation5 + %s299]]
        %s301 = sadd.s32 %s30, %s298
        %s302 = scalar_lea.vmem %s1, %s300
        %s303 = scalar_lea.vmem [#allocation2], %s301
        %p305 = scmp.lt.u32.totalorder 1, 8
        %p306 = pneg %p305
        // Predicated region
        $region163: #{tpu_custom_call.1} parent=9 // pred_check
          _
        $region164: #{tpu_custom_call.1} parent=9 // pred_check_branch
          %308 = sbr.rel (%p305) target = $region166
        $region165: #{tpu_custom_call.1} parent=9 // pred_region
          %s324 = sand.u32 1, 7
          %p325 = scmp.eq.s32.totalorder %s324, 0
          %p326 = pneg %p325
          // Predicated region
          $region178: #{tpu_custom_call.1} parent=165 // pred_check
            _
          $region179: #{tpu_custom_call.1} parent=165 // pred_check_branch
            %328 = sbr.rel (%p325) target = $region181
          $region180: #{tpu_custom_call.1} parent=165 // pred_region
            %s329 = sand.u32 1, 7
            %s330 = ssub.s32 1, %s329
            %s331 = scalar_lea.vmem %s302, %s330
            %s332 = ssub.s32 1, %s329
            %s333 = scalar_lea.vmem %s303, %s332 [#allocation2]
            %s334 = sshll.u32 1, %s329
            %s335 = ssub.s32 %s334, 1
            loop: start=0, step=1, limit=1
            $region182: #{tpu_custom_call.1} parent=180 // loop_pre_header
              _
            $region183: #{tpu_custom_call.1} parent=180 // loop_header
              %s337 = sphi 0, %s341
              %p338 = scmp.ge.s32.totalorder %s337, 1
              %s342 = sphi %s331, %s331
              %s343 = sphi %s333, %s333
            $region184: #{tpu_custom_call.1} parent=180 // loop_header_branch
              %340 = sbr.rel (%p338) target = $region188
            $region185: #{tpu_custom_call.1} parent=180 // loop_body
              %v344 = vld [vmem:[%s342] sm:%s335]
              %345 = vst [vmem:[%s343] sm:%s335] %v344
            $region186: #{tpu_custom_call.1} parent=180 // loop_footer
              %s341 = sadd.s32 1, %s337
            $region187: #{tpu_custom_call.1} parent=180 // loop_footer_branch
              %336 = sbr.rel target = $region183
            $region188: #{tpu_custom_call.1} parent=180 // loop_exit
              _
          $region181: #{tpu_custom_call.1} parent=165 // pred_fallthru
            _
        $region166: #{tpu_custom_call.1} parent=9 // pred_fallthru
          _
        // Predicated region
        $region167: #{tpu_custom_call.1} parent=9 // pred_check
          %p309 = pneg %p305
        $region168: #{tpu_custom_call.1} parent=9 // pred_check_branch
          %311 = sbr.rel (%p309) target = $region170
        $region169: #{tpu_custom_call.1} parent=9 // pred_region
          %s312 = sshll.u32 1, 1
          %s313 = ssub.s32 %s312, 1
          loop: start=0, step=1, limit=1
          $region171: #{tpu_custom_call.1} parent=169 // loop_pre_header
            _
          $region172: #{tpu_custom_call.1} parent=169 // loop_header
            %s315 = sphi 0, %s319
            %p316 = scmp.ge.s32.totalorder %s315, 1
            %s320 = sphi %s302, %s302
            %s321 = sphi %s303, %s303
          $region173: #{tpu_custom_call.1} parent=169 // loop_header_branch
            %318 = sbr.rel (%p316) target = $region177
          $region174: #{tpu_custom_call.1} parent=169 // loop_body
            %v322 = vld [vmem:[%s320] sm:%s313]
            %323 = vst [vmem:[%s321] sm:%s313] %v322
          $region175: #{tpu_custom_call.1} parent=169 // loop_footer
            %s319 = sadd.s32 1, %s315
          $region176: #{tpu_custom_call.1} parent=169 // loop_footer_branch
            %314 = sbr.rel target = $region172
          $region177: #{tpu_custom_call.1} parent=169 // loop_exit
            _
        $region170: #{tpu_custom_call.1} parent=9 // pred_fallthru
          _
        // Predicated region
        $region189: #{tpu_custom_call.1} parent=9 // pred_check
          _
        $region190: #{tpu_custom_call.1} parent=9 // pred_check_branch
          %348 = sbr.rel (0) target = $region192
        $region191: #{tpu_custom_call.1} parent=9 // pred_region
          %349 = vsyncadd %s43, 16
        $region192: #{tpu_custom_call.1} parent=9 // pred_fallthru
          _
        %s350 = sadd.s32 %s37, 6
        %s351 = sadd.s32 %s29, %s350
        %s352 = sld [smem:[#allocation5 + %s351]]
        %s353 = sadd.s32 %s30, %s350
        %s354 = scalar_lea.vmem %s1, %s352
        %s355 = scalar_lea.vmem [#allocation2], %s353
        %p357 = scmp.lt.u32.totalorder 1, 8
        %p358 = pneg %p357
        // Predicated region
        $region193: #{tpu_custom_call.1} parent=9 // pred_check
          _
        $region194: #{tpu_custom_call.1} parent=9 // pred_check_branch
          %360 = sbr.rel (%p357) target = $region196
        $region195: #{tpu_custom_call.1} parent=9 // pred_region
          %s376 = sand.u32 1, 7
          %p377 = scmp.eq.s32.totalorder %s376, 0
          %p378 = pneg %p377
          // Predicated region
          $region208: #{tpu_custom_call.1} parent=195 // pred_check
            _
          $region209: #{tpu_custom_call.1} parent=195 // pred_check_branch
            %380 = sbr.rel (%p377) target = $region211
          $region210: #{tpu_custom_call.1} parent=195 // pred_region
            %s381 = sand.u32 1, 7
            %s382 = ssub.s32 1, %s381
            %s383 = scalar_lea.vmem %s354, %s382
            %s384 = ssub.s32 1, %s381
            %s385 = scalar_lea.vmem %s355, %s384 [#allocation2]
            %s386 = sshll.u32 1, %s381
            %s387 = ssub.s32 %s386, 1
            loop: start=0, step=1, limit=1
            $region212: #{tpu_custom_call.1} parent=210 // loop_pre_header
              _
            $region213: #{tpu_custom_call.1} parent=210 // loop_header
              %s389 = sphi 0, %s393
              %p390 = scmp.ge.s32.totalorder %s389, 1
              %s394 = sphi %s383, %s383
              %s395 = sphi %s385, %s385
            $region214: #{tpu_custom_call.1} parent=210 // loop_header_branch
              %392 = sbr.rel (%p390) target = $region218
            $region215: #{tpu_custom_call.1} parent=210 // loop_body
              %v396 = vld [vmem:[%s394] sm:%s387]
              %397 = vst [vmem:[%s395] sm:%s387] %v396
            $region216: #{tpu_custom_call.1} parent=210 // loop_footer
              %s393 = sadd.s32 1, %s389
            $region217: #{tpu_custom_call.1} parent=210 // loop_footer_branch
              %388 = sbr.rel target = $region213
            $region218: #{tpu_custom_call.1} parent=210 // loop_exit
              _
          $region211: #{tpu_custom_call.1} parent=195 // pred_fallthru
            _
        $region196: #{tpu_custom_call.1} parent=9 // pred_fallthru
          _
        // Predicated region
        $region197: #{tpu_custom_call.1} parent=9 // pred_check
          %p361 = pneg %p357
        $region198: #{tpu_custom_call.1} parent=9 // pred_check_branch
          %363 = sbr.rel (%p361) target = $region200
        $region199: #{tpu_custom_call.1} parent=9 // pred_region
          %s364 = sshll.u32 1, 1
          %s365 = ssub.s32 %s364, 1
          loop: start=0, step=1, limit=1
          $region201: #{tpu_custom_call.1} parent=199 // loop_pre_header
            _
          $region202: #{tpu_custom_call.1} parent=199 // loop_header
            %s367 = sphi 0, %s371
            %p368 = scmp.ge.s32.totalorder %s367, 1
            %s372 = sphi %s354, %s354
            %s373 = sphi %s355, %s355
          $region203: #{tpu_custom_call.1} parent=199 // loop_header_branch
            %370 = sbr.rel (%p368) target = $region207
          $region204: #{tpu_custom_call.1} parent=199 // loop_body
            %v374 = vld [vmem:[%s372] sm:%s365]
            %375 = vst [vmem:[%s373] sm:%s365] %v374
          $region205: #{tpu_custom_call.1} parent=199 // loop_footer
            %s371 = sadd.s32 1, %s367
          $region206: #{tpu_custom_call.1} parent=199 // loop_footer_branch
            %366 = sbr.rel target = $region202
          $region207: #{tpu_custom_call.1} parent=199 // loop_exit
            _
        $region200: #{tpu_custom_call.1} parent=9 // pred_fallthru
          _
        // Predicated region
        $region219: #{tpu_custom_call.1} parent=9 // pred_check
          _
        $region220: #{tpu_custom_call.1} parent=9 // pred_check_branch
          %400 = sbr.rel (0) target = $region222
        $region221: #{tpu_custom_call.1} parent=9 // pred_region
          %401 = vsyncadd %s43, 16
        $region222: #{tpu_custom_call.1} parent=9 // pred_fallthru
          _
        %s402 = sadd.s32 %s37, 7
        %s403 = sadd.s32 %s29, %s402
        %s404 = sld [smem:[#allocation5 + %s403]]
        %s405 = sadd.s32 %s30, %s402
        %s406 = scalar_lea.vmem %s1, %s404
        %s407 = scalar_lea.vmem [#allocation2], %s405
        %p409 = scmp.lt.u32.totalorder 1, 8
        %p410 = pneg %p409
        // Predicated region
        $region223: #{tpu_custom_call.1} parent=9 // pred_check
          _
        $region224: #{tpu_custom_call.1} parent=9 // pred_check_branch
          %412 = sbr.rel (%p409) target = $region226
        $region225: #{tpu_custom_call.1} parent=9 // pred_region
          %s428 = sand.u32 1, 7
          %p429 = scmp.eq.s32.totalorder %s428, 0
          %p430 = pneg %p429
          // Predicated region
          $region238: #{tpu_custom_call.1} parent=225 // pred_check
            _
          $region239: #{tpu_custom_call.1} parent=225 // pred_check_branch
            %432 = sbr.rel (%p429) target = $region241
          $region240: #{tpu_custom_call.1} parent=225 // pred_region
            %s433 = sand.u32 1, 7
            %s434 = ssub.s32 1, %s433
            %s435 = scalar_lea.vmem %s406, %s434
            %s436 = ssub.s32 1, %s433
            %s437 = scalar_lea.vmem %s407, %s436 [#allocation2]
            %s438 = sshll.u32 1, %s433
            %s439 = ssub.s32 %s438, 1
            loop: start=0, step=1, limit=1
            $region242: #{tpu_custom_call.1} parent=240 // loop_pre_header
              _
            $region243: #{tpu_custom_call.1} parent=240 // loop_header
              %s441 = sphi 0, %s445
              %p442 = scmp.ge.s32.totalorder %s441, 1
              %s446 = sphi %s435, %s435
              %s447 = sphi %s437, %s437
            $region244: #{tpu_custom_call.1} parent=240 // loop_header_branch
              %444 = sbr.rel (%p442) target = $region248
            $region245: #{tpu_custom_call.1} parent=240 // loop_body
              %v448 = vld [vmem:[%s446] sm:%s439]
              %449 = vst [vmem:[%s447] sm:%s439] %v448
            $region246: #{tpu_custom_call.1} parent=240 // loop_footer
              %s445 = sadd.s32 1, %s441
            $region247: #{tpu_custom_call.1} parent=240 // loop_footer_branch
              %440 = sbr.rel target = $region243
            $region248: #{tpu_custom_call.1} parent=240 // loop_exit
              _
          $region241: #{tpu_custom_call.1} parent=225 // pred_fallthru
            _
        $region226: #{tpu_custom_call.1} parent=9 // pred_fallthru
          _
        // Predicated region
        $region227: #{tpu_custom_call.1} parent=9 // pred_check
          %p413 = pneg %p409
        $region228: #{tpu_custom_call.1} parent=9 // pred_check_branch
          %415 = sbr.rel (%p413) target = $region230
        $region229: #{tpu_custom_call.1} parent=9 // pred_region
          %s416 = sshll.u32 1, 1
          %s417 = ssub.s32 %s416, 1
          loop: start=0, step=1, limit=1
          $region231: #{tpu_custom_call.1} parent=229 // loop_pre_header
            _
          $region232: #{tpu_custom_call.1} parent=229 // loop_header
            %s419 = sphi 0, %s423
            %p420 = scmp.ge.s32.totalorder %s419, 1
            %s424 = sphi %s406, %s406
            %s425 = sphi %s407, %s407
          $region233: #{tpu_custom_call.1} parent=229 // loop_header_branch
            %422 = sbr.rel (%p420) target = $region237
          $region234: #{tpu_custom_call.1} parent=229 // loop_body
            %v426 = vld [vmem:[%s424] sm:%s417]
            %427 = vst [vmem:[%s425] sm:%s417] %v426
          $region235: #{tpu_custom_call.1} parent=229 // loop_footer
            %s423 = sadd.s32 1, %s419
          $region236: #{tpu_custom_call.1} parent=229 // loop_footer_branch
            %418 = sbr.rel target = $region232
          $region237: #{tpu_custom_call.1} parent=229 // loop_exit
            _
        $region230: #{tpu_custom_call.1} parent=9 // pred_fallthru
          _
        // Predicated region
        $region249: #{tpu_custom_call.1} parent=9 // pred_check
          _
        $region250: #{tpu_custom_call.1} parent=9 // pred_check_branch
          %452 = sbr.rel (0) target = $region252
        $region251: #{tpu_custom_call.1} parent=9 // pred_region
          %453 = vsyncadd %s43, 16
        $region252: #{tpu_custom_call.1} parent=9 // pred_fallthru
          _
      $region10: #{tpu_custom_call.1} parent=4 // loop_footer
        %s36 = sadd.s32 1, %s32
      $region11: #{tpu_custom_call.1} parent=4 // loop_footer_branch
        %31 = sbr.rel target = $region7
      $region12: #{tpu_custom_call.1} parent=4 // loop_exit
        _
    $region5: #{tpu_custom_call.1} parent=1 // pred_fallthru
      _
    %s454 = sadd.s32 0, 1
    %p455 = scmp.lt.s32.totalorder %s454, 1
    // Predicated region
    $region253: #{tpu_custom_call.1} parent=1 // pred_check
      %p456 = pneg %p455
    $region254: #{tpu_custom_call.1} parent=1 // pred_check_branch
      %458 = sbr.rel (%p456) target = $region256
    $region255: #{tpu_custom_call.1} parent=1 // pred_region
      %s459 = sadd.s32 %s16, 1
      %s460 = ssub.s32 1, %s24
      %s461 = smul.u32 %s459, 16
      %s462 = smul.u32 %s460, 16
      loop: start=0, step=1, limit=2
      $region257: #{tpu_custom_call.1} parent=255 // loop_pre_header
        _
      $region258: #{tpu_custom_call.1} parent=255 // loop_header
        %s464 = sphi 0, %s468
        %p465 = scmp.ge.s32.totalorder %s464, 2
      $region259: #{tpu_custom_call.1} parent=255 // loop_header_branch
        %467 = sbr.rel (%p465) target = $region263
      $region260: #{tpu_custom_call.1} parent=255 // loop_body
        %s469 = smul.u32 %s464, 8
        %s470 = sadd.s32 %s461, %s469
        %s471 = sld [smem:[#allocation5 + %s470]]
        %s472 = sadd.s32 %s462, %s469
        %s473 = scalar_lea.vmem %s1, %s471
        %s474 = scalar_lea.vmem [#allocation2], %s472
        %s475 = scalar_lea.sflag [#allocation3], %s460
        %p477 = scmp.lt.u32.totalorder 1, 8
        %p478 = pneg %p477
        // Predicated region
        $region264: #{tpu_custom_call.1} parent=260 // pred_check
          _
        $region265: #{tpu_custom_call.1} parent=260 // pred_check_branch
          %480 = sbr.rel (%p477) target = $region267
        $region266: #{tpu_custom_call.1} parent=260 // pred_region
          %s496 = sand.u32 1, 7
          %p497 = scmp.eq.s32.totalorder %s496, 0
          %p498 = pneg %p497
          // Predicated region
          $region279: #{tpu_custom_call.1} parent=266 // pred_check
            _
          $region280: #{tpu_custom_call.1} parent=266 // pred_check_branch
            %500 = sbr.rel (%p497) target = $region282
          $region281: #{tpu_custom_call.1} parent=266 // pred_region
            %s501 = sand.u32 1, 7
            %s502 = ssub.s32 1, %s501
            %s503 = scalar_lea.vmem %s473, %s502
            %s504 = ssub.s32 1, %s501
            %s505 = scalar_lea.vmem %s474, %s504 [#allocation2]
            %s506 = sshll.u32 1, %s501
            %s507 = ssub.s32 %s506, 1
            loop: start=0, step=1, limit=1
            $region283: #{tpu_custom_call.1} parent=281 // loop_pre_header
              _
            $region284: #{tpu_custom_call.1} parent=281 // loop_header
              %s509 = sphi 0, %s513
              %p510 = scmp.ge.s32.totalorder %s509, 1
              %s514 = sphi %s503, %s503
              %s515 = sphi %s505, %s505
            $region285: #{tpu_custom_call.1} parent=281 // loop_header_branch
              %512 = sbr.rel (%p510) target = $region289
            $region286: #{tpu_custom_call.1} parent=281 // loop_body
              %v516 = vld [vmem:[%s514] sm:%s507]
              %517 = vst [vmem:[%s515] sm:%s507] %v516
            $region287: #{tpu_custom_call.1} parent=281 // loop_footer
              %s513 = sadd.s32 1, %s509
            $region288: #{tpu_custom_call.1} parent=281 // loop_footer_branch
              %508 = sbr.rel target = $region284
            $region289: #{tpu_custom_call.1} parent=281 // loop_exit
              _
          $region282: #{tpu_custom_call.1} parent=266 // pred_fallthru
            _
        $region267: #{tpu_custom_call.1} parent=260 // pred_fallthru
          _
        // Predicated region
        $region268: #{tpu_custom_call.1} parent=260 // pred_check
          %p481 = pneg %p477
        $region269: #{tpu_custom_call.1} parent=260 // pred_check_branch
          %483 = sbr.rel (%p481) target = $region271
        $region270: #{tpu_custom_call.1} parent=260 // pred_region
          %s484 = sshll.u32 1, 1
          %s485 = ssub.s32 %s484, 1
          loop: start=0, step=1, limit=1
          $region272: #{tpu_custom_call.1} parent=270 // loop_pre_header
            _
          $region273: #{tpu_custom_call.1} parent=270 // loop_header
            %s487 = sphi 0, %s491
            %p488 = scmp.ge.s32.totalorder %s487, 1
            %s492 = sphi %s473, %s473
            %s493 = sphi %s474, %s474
          $region274: #{tpu_custom_call.1} parent=270 // loop_header_branch
            %490 = sbr.rel (%p488) target = $region278
          $region275: #{tpu_custom_call.1} parent=270 // loop_body
            %v494 = vld [vmem:[%s492] sm:%s485]
            %495 = vst [vmem:[%s493] sm:%s485] %v494
          $region276: #{tpu_custom_call.1} parent=270 // loop_footer
            %s491 = sadd.s32 1, %s487
          $region277: #{tpu_custom_call.1} parent=270 // loop_footer_branch
            %486 = sbr.rel target = $region273
          $region278: #{tpu_custom_call.1} parent=270 // loop_exit
            _
        $region271: #{tpu_custom_call.1} parent=260 // pred_fallthru
          _
        // Predicated region
        $region290: #{tpu_custom_call.1} parent=260 // pred_check
          _
        $region291: #{tpu_custom_call.1} parent=260 // pred_check_branch
          %520 = sbr.rel (0) target = $region293
        $region292: #{tpu_custom_call.1} parent=260 // pred_region
          %521 = vsyncadd %s475, 16
        $region293: #{tpu_custom_call.1} parent=260 // pred_fallthru
          _
        %s522 = sadd.s32 %s469, 1
        %s523 = sadd.s32 %s461, %s522
        %s524 = sld [smem:[#allocation5 + %s523]]
        %s525 = sadd.s32 %s462, %s522
        %s526 = scalar_lea.vmem %s1, %s524
        %s527 = scalar_lea.vmem [#allocation2], %s525
        %p529 = scmp.lt.u32.totalorder 1, 8
        %p530 = pneg %p529
        // Predicated region
        $region294: #{tpu_custom_call.1} parent=260 // pred_check
          _
        $region295: #{tpu_custom_call.1} parent=260 // pred_check_branch
          %532 = sbr.rel (%p529) target = $region297
        $region296: #{tpu_custom_call.1} parent=260 // pred_region
          %s548 = sand.u32 1, 7
          %p549 = scmp.eq.s32.totalorder %s548, 0
          %p550 = pneg %p549
          // Predicated region
          $region309: #{tpu_custom_call.1} parent=296 // pred_check
            _
          $region310: #{tpu_custom_call.1} parent=296 // pred_check_branch
            %552 = sbr.rel (%p549) target = $region312
          $region311: #{tpu_custom_call.1} parent=296 // pred_region
            %s553 = sand.u32 1, 7
            %s554 = ssub.s32 1, %s553
            %s555 = scalar_lea.vmem %s526, %s554
            %s556 = ssub.s32 1, %s553
            %s557 = scalar_lea.vmem %s527, %s556 [#allocation2]
            %s558 = sshll.u32 1, %s553
            %s559 = ssub.s32 %s558, 1
            loop: start=0, step=1, limit=1
            $region313: #{tpu_custom_call.1} parent=311 // loop_pre_header
              _
            $region314: #{tpu_custom_call.1} parent=311 // loop_header
              %s561 = sphi 0, %s565
              %p562 = scmp.ge.s32.totalorder %s561, 1
              %s566 = sphi %s555, %s555
              %s567 = sphi %s557, %s557
            $region315: #{tpu_custom_call.1} parent=311 // loop_header_branch
              %564 = sbr.rel (%p562) target = $region319
            $region316: #{tpu_custom_call.1} parent=311 // loop_body
              %v568 = vld [vmem:[%s566] sm:%s559]
              %569 = vst [vmem:[%s567] sm:%s559] %v568
            $region317: #{tpu_custom_call.1} parent=311 // loop_footer
              %s565 = sadd.s32 1, %s561
            $region318: #{tpu_custom_call.1} parent=311 // loop_footer_branch
              %560 = sbr.rel target = $region314
            $region319: #{tpu_custom_call.1} parent=311 // loop_exit
              _
          $region312: #{tpu_custom_call.1} parent=296 // pred_fallthru
            _
        $region297: #{tpu_custom_call.1} parent=260 // pred_fallthru
          _
        // Predicated region
        $region298: #{tpu_custom_call.1} parent=260 // pred_check
          %p533 = pneg %p529
        $region299: #{tpu_custom_call.1} parent=260 // pred_check_branch
          %535 = sbr.rel (%p533) target = $region301
        $region300: #{tpu_custom_call.1} parent=260 // pred_region
          %s536 = sshll.u32 1, 1
          %s537 = ssub.s32 %s536, 1
          loop: start=0, step=1, limit=1
          $region302: #{tpu_custom_call.1} parent=300 // loop_pre_header
            _
          $region303: #{tpu_custom_call.1} parent=300 // loop_header
            %s539 = sphi 0, %s543
            %p540 = scmp.ge.s32.totalorder %s539, 1
            %s544 = sphi %s526, %s526
            %s545 = sphi %s527, %s527
          $region304: #{tpu_custom_call.1} parent=300 // loop_header_branch
            %542 = sbr.rel (%p540) target = $region308
          $region305: #{tpu_custom_call.1} parent=300 // loop_body
            %v546 = vld [vmem:[%s544] sm:%s537]
            %547 = vst [vmem:[%s545] sm:%s537] %v546
          $region306: #{tpu_custom_call.1} parent=300 // loop_footer
            %s543 = sadd.s32 1, %s539
          $region307: #{tpu_custom_call.1} parent=300 // loop_footer_branch
            %538 = sbr.rel target = $region303
          $region308: #{tpu_custom_call.1} parent=300 // loop_exit
            _
        $region301: #{tpu_custom_call.1} parent=260 // pred_fallthru
          _
        // Predicated region
        $region320: #{tpu_custom_call.1} parent=260 // pred_check
          _
        $region321: #{tpu_custom_call.1} parent=260 // pred_check_branch
          %572 = sbr.rel (0) target = $region323
        $region322: #{tpu_custom_call.1} parent=260 // pred_region
          %573 = vsyncadd %s475, 16
        $region323: #{tpu_custom_call.1} parent=260 // pred_fallthru
          _
        %s574 = sadd.s32 %s469, 2
        %s575 = sadd.s32 %s461, %s574
        %s576 = sld [smem:[#allocation5 + %s575]]
        %s577 = sadd.s32 %s462, %s574
        %s578 = scalar_lea.vmem %s1, %s576
        %s579 = scalar_lea.vmem [#allocation2], %s577
        %p581 = scmp.lt.u32.totalorder 1, 8
        %p582 = pneg %p581
        // Predicated region
        $region324: #{tpu_custom_call.1} parent=260 // pred_check
          _
        $region325: #{tpu_custom_call.1} parent=260 // pred_check_branch
          %584 = sbr.rel (%p581) target = $region327
        $region326: #{tpu_custom_call.1} parent=260 // pred_region
          %s600 = sand.u32 1, 7
          %p601 = scmp.eq.s32.totalorder %s600, 0
          %p602 = pneg %p601
          // Predicated region
          $region339: #{tpu_custom_call.1} parent=326 // pred_check
            _
          $region340: #{tpu_custom_call.1} parent=326 // pred_check_branch
            %604 = sbr.rel (%p601) target = $region342
          $region341: #{tpu_custom_call.1} parent=326 // pred_region
            %s605 = sand.u32 1, 7
            %s606 = ssub.s32 1, %s605
            %s607 = scalar_lea.vmem %s578, %s606
            %s608 = ssub.s32 1, %s605
            %s609 = scalar_lea.vmem %s579, %s608 [#allocation2]
            %s610 = sshll.u32 1, %s605
            %s611 = ssub.s32 %s610, 1
            loop: start=0, step=1, limit=1
            $region343: #{tpu_custom_call.1} parent=341 // loop_pre_header
              _
            $region344: #{tpu_custom_call.1} parent=341 // loop_header
              %s613 = sphi 0, %s617
              %p614 = scmp.ge.s32.totalorder %s613, 1
              %s618 = sphi %s607, %s607
              %s619 = sphi %s609, %s609
            $region345: #{tpu_custom_call.1} parent=341 // loop_header_branch
              %616 = sbr.rel (%p614) target = $region349
            $region346: #{tpu_custom_call.1} parent=341 // loop_body
              %v620 = vld [vmem:[%s618] sm:%s611]
              %621 = vst [vmem:[%s619] sm:%s611] %v620
            $region347: #{tpu_custom_call.1} parent=341 // loop_footer
              %s617 = sadd.s32 1, %s613
            $region348: #{tpu_custom_call.1} parent=341 // loop_footer_branch
              %612 = sbr.rel target = $region344
            $region349: #{tpu_custom_call.1} parent=341 // loop_exit
              _
          $region342: #{tpu_custom_call.1} parent=326 // pred_fallthru
            _
        $region327: #{tpu_custom_call.1} parent=260 // pred_fallthru
          _
        // Predicated region
        $region328: #{tpu_custom_call.1} parent=260 // pred_check
          %p585 = pneg %p581
        $region329: #{tpu_custom_call.1} parent=260 // pred_check_branch
          %587 = sbr.rel (%p585) target = $region331
        $region330: #{tpu_custom_call.1} parent=260 // pred_region
          %s588 = sshll.u32 1, 1
          %s589 = ssub.s32 %s588, 1
          loop: start=0, step=1, limit=1
          $region332: #{tpu_custom_call.1} parent=330 // loop_pre_header
            _
          $region333: #{tpu_custom_call.1} parent=330 // loop_header
            %s591 = sphi 0, %s595
            %p592 = scmp.ge.s32.totalorder %s591, 1
            %s596 = sphi %s578, %s578
            %s597 = sphi %s579, %s579
          $region334: #{tpu_custom_call.1} parent=330 // loop_header_branch
            %594 = sbr.rel (%p592) target = $region338
          $region335: #{tpu_custom_call.1} parent=330 // loop_body
            %v598 = vld [vmem:[%s596] sm:%s589]
            %599 = vst [vmem:[%s597] sm:%s589] %v598
          $region336: #{tpu_custom_call.1} parent=330 // loop_footer
            %s595 = sadd.s32 1, %s591
          $region337: #{tpu_custom_call.1} parent=330 // loop_footer_branch
            %590 = sbr.rel target = $region333
          $region338: #{tpu_custom_call.1} parent=330 // loop_exit
            _
        $region331: #{tpu_custom_call.1} parent=260 // pred_fallthru
          _
        // Predicated region
        $region350: #{tpu_custom_call.1} parent=260 // pred_check
          _
        $region351: #{tpu_custom_call.1} parent=260 // pred_check_branch
          %624 = sbr.rel (0) target = $region353
        $region352: #{tpu_custom_call.1} parent=260 // pred_region
          %625 = vsyncadd %s475, 16
        $region353: #{tpu_custom_call.1} parent=260 // pred_fallthru
          _
        %s626 = sadd.s32 %s469, 3
        %s627 = sadd.s32 %s461, %s626
        %s628 = sld [smem:[#allocation5 + %s627]]
        %s629 = sadd.s32 %s462, %s626
        %s630 = scalar_lea.vmem %s1, %s628
        %s631 = scalar_lea.vmem [#allocation2], %s629
        %p633 = scmp.lt.u32.totalorder 1, 8
        %p634 = pneg %p633
        // Predicated region
        $region354: #{tpu_custom_call.1} parent=260 // pred_check
          _
        $region355: #{tpu_custom_call.1} parent=260 // pred_check_branch
          %636 = sbr.rel (%p633) target = $region357
        $region356: #{tpu_custom_call.1} parent=260 // pred_region
          %s652 = sand.u32 1, 7
          %p653 = scmp.eq.s32.totalorder %s652, 0
          %p654 = pneg %p653
          // Predicated region
          $region369: #{tpu_custom_call.1} parent=356 // pred_check
            _
          $region370: #{tpu_custom_call.1} parent=356 // pred_check_branch
            %656 = sbr.rel (%p653) target = $region372
          $region371: #{tpu_custom_call.1} parent=356 // pred_region
            %s657 = sand.u32 1, 7
            %s658 = ssub.s32 1, %s657
            %s659 = scalar_lea.vmem %s630, %s658
            %s660 = ssub.s32 1, %s657
            %s661 = scalar_lea.vmem %s631, %s660 [#allocation2]
            %s662 = sshll.u32 1, %s657
            %s663 = ssub.s32 %s662, 1
            loop: start=0, step=1, limit=1
            $region373: #{tpu_custom_call.1} parent=371 // loop_pre_header
              _
            $region374: #{tpu_custom_call.1} parent=371 // loop_header
              %s665 = sphi 0, %s669
              %p666 = scmp.ge.s32.totalorder %s665, 1
              %s670 = sphi %s659, %s659
              %s671 = sphi %s661, %s661
            $region375: #{tpu_custom_call.1} parent=371 // loop_header_branch
              %668 = sbr.rel (%p666) target = $region379
            $region376: #{tpu_custom_call.1} parent=371 // loop_body
              %v672 = vld [vmem:[%s670] sm:%s663]
              %673 = vst [vmem:[%s671] sm:%s663] %v672
            $region377: #{tpu_custom_call.1} parent=371 // loop_footer
              %s669 = sadd.s32 1, %s665
            $region378: #{tpu_custom_call.1} parent=371 // loop_footer_branch
              %664 = sbr.rel target = $region374
            $region379: #{tpu_custom_call.1} parent=371 // loop_exit
              _
          $region372: #{tpu_custom_call.1} parent=356 // pred_fallthru
            _
        $region357: #{tpu_custom_call.1} parent=260 // pred_fallthru
          _
        // Predicated region
        $region358: #{tpu_custom_call.1} parent=260 // pred_check
          %p637 = pneg %p633
        $region359: #{tpu_custom_call.1} parent=260 // pred_check_branch
          %639 = sbr.rel (%p637) target = $region361
        $region360: #{tpu_custom_call.1} parent=260 // pred_region
          %s640 = sshll.u32 1, 1
          %s641 = ssub.s32 %s640, 1
          loop: start=0, step=1, limit=1
          $region362: #{tpu_custom_call.1} parent=360 // loop_pre_header
            _
          $region363: #{tpu_custom_call.1} parent=360 // loop_header
            %s643 = sphi 0, %s647
            %p644 = scmp.ge.s32.totalorder %s643, 1
            %s648 = sphi %s630, %s630
            %s649 = sphi %s631, %s631
          $region364: #{tpu_custom_call.1} parent=360 // loop_header_branch
            %646 = sbr.rel (%p644) target = $region368
          $region365: #{tpu_custom_call.1} parent=360 // loop_body
            %v650 = vld [vmem:[%s648] sm:%s641]
            %651 = vst [vmem:[%s649] sm:%s641] %v650
          $region366: #{tpu_custom_call.1} parent=360 // loop_footer
            %s647 = sadd.s32 1, %s643
          $region367: #{tpu_custom_call.1} parent=360 // loop_footer_branch
            %642 = sbr.rel target = $region363
          $region368: #{tpu_custom_call.1} parent=360 // loop_exit
            _
        $region361: #{tpu_custom_call.1} parent=260 // pred_fallthru
          _
        // Predicated region
        $region380: #{tpu_custom_call.1} parent=260 // pred_check
          _
        $region381: #{tpu_custom_call.1} parent=260 // pred_check_branch
          %676 = sbr.rel (0) target = $region383
        $region382: #{tpu_custom_call.1} parent=260 // pred_region
          %677 = vsyncadd %s475, 16
        $region383: #{tpu_custom_call.1} parent=260 // pred_fallthru
          _
        %s678 = sadd.s32 %s469, 4
        %s679 = sadd.s32 %s461, %s678
        %s680 = sld [smem:[#allocation5 + %s679]]
        %s681 = sadd.s32 %s462, %s678
        %s682 = scalar_lea.vmem %s1, %s680
        %s683 = scalar_lea.vmem [#allocation2], %s681
        %p685 = scmp.lt.u32.totalorder 1, 8
        %p686 = pneg %p685
        // Predicated region
        $region384: #{tpu_custom_call.1} parent=260 // pred_check
          _
        $region385: #{tpu_custom_call.1} parent=260 // pred_check_branch
          %688 = sbr.rel (%p685) target = $region387
        $region386: #{tpu_custom_call.1} parent=260 // pred_region
          %s704 = sand.u32 1, 7
          %p705 = scmp.eq.s32.totalorder %s704, 0
          %p706 = pneg %p705
          // Predicated region
          $region399: #{tpu_custom_call.1} parent=386 // pred_check
            _
          $region400: #{tpu_custom_call.1} parent=386 // pred_check_branch
            %708 = sbr.rel (%p705) target = $region402
          $region401: #{tpu_custom_call.1} parent=386 // pred_region
            %s709 = sand.u32 1, 7
            %s710 = ssub.s32 1, %s709
            %s711 = scalar_lea.vmem %s682, %s710
            %s712 = ssub.s32 1, %s709
            %s713 = scalar_lea.vmem %s683, %s712 [#allocation2]
            %s714 = sshll.u32 1, %s709
            %s715 = ssub.s32 %s714, 1
            loop: start=0, step=1, limit=1
            $region403: #{tpu_custom_call.1} parent=401 // loop_pre_header
              _
            $region404: #{tpu_custom_call.1} parent=401 // loop_header
              %s717 = sphi 0, %s721
              %p718 = scmp.ge.s32.totalorder %s717, 1
              %s722 = sphi %s711, %s711
              %s723 = sphi %s713, %s713
            $region405: #{tpu_custom_call.1} parent=401 // loop_header_branch
              %720 = sbr.rel (%p718) target = $region409
            $region406: #{tpu_custom_call.1} parent=401 // loop_body
              %v724 = vld [vmem:[%s722] sm:%s715]
              %725 = vst [vmem:[%s723] sm:%s715] %v724
            $region407: #{tpu_custom_call.1} parent=401 // loop_footer
              %s721 = sadd.s32 1, %s717
            $region408: #{tpu_custom_call.1} parent=401 // loop_footer_branch
              %716 = sbr.rel target = $region404
            $region409: #{tpu_custom_call.1} parent=401 // loop_exit
              _
          $region402: #{tpu_custom_call.1} parent=386 // pred_fallthru
            _
        $region387: #{tpu_custom_call.1} parent=260 // pred_fallthru
          _
        // Predicated region
        $region388: #{tpu_custom_call.1} parent=260 // pred_check
          %p689 = pneg %p685
        $region389: #{tpu_custom_call.1} parent=260 // pred_check_branch
          %691 = sbr.rel (%p689) target = $region391
        $region390: #{tpu_custom_call.1} parent=260 // pred_region
          %s692 = sshll.u32 1, 1
          %s693 = ssub.s32 %s692, 1
          loop: start=0, step=1, limit=1
          $region392: #{tpu_custom_call.1} parent=390 // loop_pre_header
            _
          $region393: #{tpu_custom_call.1} parent=390 // loop_header
            %s695 = sphi 0, %s699
            %p696 = scmp.ge.s32.totalorder %s695, 1
            %s700 = sphi %s682, %s682
            %s701 = sphi %s683, %s683
          $region394: #{tpu_custom_call.1} parent=390 // loop_header_branch
            %698 = sbr.rel (%p696) target = $region398
          $region395: #{tpu_custom_call.1} parent=390 // loop_body
            %v702 = vld [vmem:[%s700] sm:%s693]
            %703 = vst [vmem:[%s701] sm:%s693] %v702
          $region396: #{tpu_custom_call.1} parent=390 // loop_footer
            %s699 = sadd.s32 1, %s695
          $region397: #{tpu_custom_call.1} parent=390 // loop_footer_branch
            %694 = sbr.rel target = $region393
          $region398: #{tpu_custom_call.1} parent=390 // loop_exit
            _
        $region391: #{tpu_custom_call.1} parent=260 // pred_fallthru
          _
        // Predicated region
        $region410: #{tpu_custom_call.1} parent=260 // pred_check
          _
        $region411: #{tpu_custom_call.1} parent=260 // pred_check_branch
          %728 = sbr.rel (0) target = $region413
        $region412: #{tpu_custom_call.1} parent=260 // pred_region
          %729 = vsyncadd %s475, 16
        $region413: #{tpu_custom_call.1} parent=260 // pred_fallthru
          _
        %s730 = sadd.s32 %s469, 5
        %s731 = sadd.s32 %s461, %s730
        %s732 = sld [smem:[#allocation5 + %s731]]
        %s733 = sadd.s32 %s462, %s730
        %s734 = scalar_lea.vmem %s1, %s732
        %s735 = scalar_lea.vmem [#allocation2], %s733
        %p737 = scmp.lt.u32.totalorder 1, 8
        %p738 = pneg %p737
        // Predicated region
        $region414: #{tpu_custom_call.1} parent=260 // pred_check
          _
        $region415: #{tpu_custom_call.1} parent=260 // pred_check_branch
          %740 = sbr.rel (%p737) target = $region417
        $region416: #{tpu_custom_call.1} parent=260 // pred_region
          %s756 = sand.u32 1, 7
          %p757 = scmp.eq.s32.totalorder %s756, 0
          %p758 = pneg %p757
          // Predicated region
          $region429: #{tpu_custom_call.1} parent=416 // pred_check
            _
          $region430: #{tpu_custom_call.1} parent=416 // pred_check_branch
            %760 = sbr.rel (%p757) target = $region432
          $region431: #{tpu_custom_call.1} parent=416 // pred_region
            %s761 = sand.u32 1, 7
            %s762 = ssub.s32 1, %s761
            %s763 = scalar_lea.vmem %s734, %s762
            %s764 = ssub.s32 1, %s761
            %s765 = scalar_lea.vmem %s735, %s764 [#allocation2]
            %s766 = sshll.u32 1, %s761
            %s767 = ssub.s32 %s766, 1
            loop: start=0, step=1, limit=1
            $region433: #{tpu_custom_call.1} parent=431 // loop_pre_header
              _
            $region434: #{tpu_custom_call.1} parent=431 // loop_header
              %s769 = sphi 0, %s773
              %p770 = scmp.ge.s32.totalorder %s769, 1
              %s774 = sphi %s763, %s763
              %s775 = sphi %s765, %s765
            $region435: #{tpu_custom_call.1} parent=431 // loop_header_branch
              %772 = sbr.rel (%p770) target = $region439
            $region436: #{tpu_custom_call.1} parent=431 // loop_body
              %v776 = vld [vmem:[%s774] sm:%s767]
              %777 = vst [vmem:[%s775] sm:%s767] %v776
            $region437: #{tpu_custom_call.1} parent=431 // loop_footer
              %s773 = sadd.s32 1, %s769
            $region438: #{tpu_custom_call.1} parent=431 // loop_footer_branch
              %768 = sbr.rel target = $region434
            $region439: #{tpu_custom_call.1} parent=431 // loop_exit
              _
          $region432: #{tpu_custom_call.1} parent=416 // pred_fallthru
            _
        $region417: #{tpu_custom_call.1} parent=260 // pred_fallthru
          _
        // Predicated region
        $region418: #{tpu_custom_call.1} parent=260 // pred_check
          %p741 = pneg %p737
        $region419: #{tpu_custom_call.1} parent=260 // pred_check_branch
          %743 = sbr.rel (%p741) target = $region421
        $region420: #{tpu_custom_call.1} parent=260 // pred_region
          %s744 = sshll.u32 1, 1
          %s745 = ssub.s32 %s744, 1
          loop: start=0, step=1, limit=1
          $region422: #{tpu_custom_call.1} parent=420 // loop_pre_header
            _
          $region423: #{tpu_custom_call.1} parent=420 // loop_header
            %s747 = sphi 0, %s751
            %p748 = scmp.ge.s32.totalorder %s747, 1
            %s752 = sphi %s734, %s734
            %s753 = sphi %s735, %s735
          $region424: #{tpu_custom_call.1} parent=420 // loop_header_branch
            %750 = sbr.rel (%p748) target = $region428
          $region425: #{tpu_custom_call.1} parent=420 // loop_body
            %v754 = vld [vmem:[%s752] sm:%s745]
            %755 = vst [vmem:[%s753] sm:%s745] %v754
          $region426: #{tpu_custom_call.1} parent=420 // loop_footer
            %s751 = sadd.s32 1, %s747
          $region427: #{tpu_custom_call.1} parent=420 // loop_footer_branch
            %746 = sbr.rel target = $region423
          $region428: #{tpu_custom_call.1} parent=420 // loop_exit
            _
        $region421: #{tpu_custom_call.1} parent=260 // pred_fallthru
          _
        // Predicated region
        $region440: #{tpu_custom_call.1} parent=260 // pred_check
          _
        $region441: #{tpu_custom_call.1} parent=260 // pred_check_branch
          %780 = sbr.rel (0) target = $region443
        $region442: #{tpu_custom_call.1} parent=260 // pred_region
          %781 = vsyncadd %s475, 16
        $region443: #{tpu_custom_call.1} parent=260 // pred_fallthru
          _
        %s782 = sadd.s32 %s469, 6
        %s783 = sadd.s32 %s461, %s782
        %s784 = sld [smem:[#allocation5 + %s783]]
        %s785 = sadd.s32 %s462, %s782
        %s786 = scalar_lea.vmem %s1, %s784
        %s787 = scalar_lea.vmem [#allocation2], %s785
        %p789 = scmp.lt.u32.totalorder 1, 8
        %p790 = pneg %p789
        // Predicated region
        $region444: #{tpu_custom_call.1} parent=260 // pred_check
          _
        $region445: #{tpu_custom_call.1} parent=260 // pred_check_branch
          %792 = sbr.rel (%p789) target = $region447
        $region446: #{tpu_custom_call.1} parent=260 // pred_region
          %s808 = sand.u32 1, 7
          %p809 = scmp.eq.s32.totalorder %s808, 0
          %p810 = pneg %p809
          // Predicated region
          $region459: #{tpu_custom_call.1} parent=446 // pred_check
            _
          $region460: #{tpu_custom_call.1} parent=446 // pred_check_branch
            %812 = sbr.rel (%p809) target = $region462
          $region461: #{tpu_custom_call.1} parent=446 // pred_region
            %s813 = sand.u32 1, 7
            %s814 = ssub.s32 1, %s813
            %s815 = scalar_lea.vmem %s786, %s814
            %s816 = ssub.s32 1, %s813
            %s817 = scalar_lea.vmem %s787, %s816 [#allocation2]
            %s818 = sshll.u32 1, %s813
            %s819 = ssub.s32 %s818, 1
            loop: start=0, step=1, limit=1
            $region463: #{tpu_custom_call.1} parent=461 // loop_pre_header
              _
            $region464: #{tpu_custom_call.1} parent=461 // loop_header
              %s821 = sphi 0, %s825
              %p822 = scmp.ge.s32.totalorder %s821, 1
              %s826 = sphi %s815, %s815
              %s827 = sphi %s817, %s817
            $region465: #{tpu_custom_call.1} parent=461 // loop_header_branch
              %824 = sbr.rel (%p822) target = $region469
            $region466: #{tpu_custom_call.1} parent=461 // loop_body
              %v828 = vld [vmem:[%s826] sm:%s819]
              %829 = vst [vmem:[%s827] sm:%s819] %v828
            $region467: #{tpu_custom_call.1} parent=461 // loop_footer
              %s825 = sadd.s32 1, %s821
            $region468: #{tpu_custom_call.1} parent=461 // loop_footer_branch
              %820 = sbr.rel target = $region464
            $region469: #{tpu_custom_call.1} parent=461 // loop_exit
              _
          $region462: #{tpu_custom_call.1} parent=446 // pred_fallthru
            _
        $region447: #{tpu_custom_call.1} parent=260 // pred_fallthru
          _
        // Predicated region
        $region448: #{tpu_custom_call.1} parent=260 // pred_check
          %p793 = pneg %p789
        $region449: #{tpu_custom_call.1} parent=260 // pred_check_branch
          %795 = sbr.rel (%p793) target = $region451
        $region450: #{tpu_custom_call.1} parent=260 // pred_region
          %s796 = sshll.u32 1, 1
          %s797 = ssub.s32 %s796, 1
          loop: start=0, step=1, limit=1
          $region452: #{tpu_custom_call.1} parent=450 // loop_pre_header
            _
          $region453: #{tpu_custom_call.1} parent=450 // loop_header
            %s799 = sphi 0, %s803
            %p800 = scmp.ge.s32.totalorder %s799, 1
            %s804 = sphi %s786, %s786
            %s805 = sphi %s787, %s787
          $region454: #{tpu_custom_call.1} parent=450 // loop_header_branch
            %802 = sbr.rel (%p800) target = $region458
          $region455: #{tpu_custom_call.1} parent=450 // loop_body
            %v806 = vld [vmem:[%s804] sm:%s797]
            %807 = vst [vmem:[%s805] sm:%s797] %v806
          $region456: #{tpu_custom_call.1} parent=450 // loop_footer
            %s803 = sadd.s32 1, %s799
          $region457: #{tpu_custom_call.1} parent=450 // loop_footer_branch
            %798 = sbr.rel target = $region453
          $region458: #{tpu_custom_call.1} parent=450 // loop_exit
            _
        $region451: #{tpu_custom_call.1} parent=260 // pred_fallthru
          _
        // Predicated region
        $region470: #{tpu_custom_call.1} parent=260 // pred_check
          _
        $region471: #{tpu_custom_call.1} parent=260 // pred_check_branch
          %832 = sbr.rel (0) target = $region473
        $region472: #{tpu_custom_call.1} parent=260 // pred_region
          %833 = vsyncadd %s475, 16
        $region473: #{tpu_custom_call.1} parent=260 // pred_fallthru
          _
        %s834 = sadd.s32 %s469, 7
        %s835 = sadd.s32 %s461, %s834
        %s836 = sld [smem:[#allocation5 + %s835]]
        %s837 = sadd.s32 %s462, %s834
        %s838 = scalar_lea.vmem %s1, %s836
        %s839 = scalar_lea.vmem [#allocation2], %s837
        %p841 = scmp.lt.u32.totalorder 1, 8
        %p842 = pneg %p841
        // Predicated region
        $region474: #{tpu_custom_call.1} parent=260 // pred_check
          _
        $region475: #{tpu_custom_call.1} parent=260 // pred_check_branch
          %844 = sbr.rel (%p841) target = $region477
        $region476: #{tpu_custom_call.1} parent=260 // pred_region
          %s860 = sand.u32 1, 7
          %p861 = scmp.eq.s32.totalorder %s860, 0
          %p862 = pneg %p861
          // Predicated region
          $region489: #{tpu_custom_call.1} parent=476 // pred_check
            _
          $region490: #{tpu_custom_call.1} parent=476 // pred_check_branch
            %864 = sbr.rel (%p861) target = $region492
          $region491: #{tpu_custom_call.1} parent=476 // pred_region
            %s865 = sand.u32 1, 7
            %s866 = ssub.s32 1, %s865
            %s867 = scalar_lea.vmem %s838, %s866
            %s868 = ssub.s32 1, %s865
            %s869 = scalar_lea.vmem %s839, %s868 [#allocation2]
            %s870 = sshll.u32 1, %s865
            %s871 = ssub.s32 %s870, 1
            loop: start=0, step=1, limit=1
            $region493: #{tpu_custom_call.1} parent=491 // loop_pre_header
              _
            $region494: #{tpu_custom_call.1} parent=491 // loop_header
              %s873 = sphi 0, %s877
              %p874 = scmp.ge.s32.totalorder %s873, 1
              %s878 = sphi %s867, %s867
              %s879 = sphi %s869, %s869
            $region495: #{tpu_custom_call.1} parent=491 // loop_header_branch
              %876 = sbr.rel (%p874) target = $region499
            $region496: #{tpu_custom_call.1} parent=491 // loop_body
              %v880 = vld [vmem:[%s878] sm:%s871]
              %881 = vst [vmem:[%s879] sm:%s871] %v880
            $region497: #{tpu_custom_call.1} parent=491 // loop_footer
              %s877 = sadd.s32 1, %s873
            $region498: #{tpu_custom_call.1} parent=491 // loop_footer_branch
              %872 = sbr.rel target = $region494
            $region499: #{tpu_custom_call.1} parent=491 // loop_exit
              _
          $region492: #{tpu_custom_call.1} parent=476 // pred_fallthru
            _
        $region477: #{tpu_custom_call.1} parent=260 // pred_fallthru
          _
        // Predicated region
        $region478: #{tpu_custom_call.1} parent=260 // pred_check
          %p845 = pneg %p841
        $region479: #{tpu_custom_call.1} parent=260 // pred_check_branch
          %847 = sbr.rel (%p845) target = $region481
        $region480: #{tpu_custom_call.1} parent=260 // pred_region
          %s848 = sshll.u32 1, 1
          %s849 = ssub.s32 %s848, 1
          loop: start=0, step=1, limit=1
          $region482: #{tpu_custom_call.1} parent=480 // loop_pre_header
            _
          $region483: #{tpu_custom_call.1} parent=480 // loop_header
            %s851 = sphi 0, %s855
            %p852 = scmp.ge.s32.totalorder %s851, 1
            %s856 = sphi %s838, %s838
            %s857 = sphi %s839, %s839
          $region484: #{tpu_custom_call.1} parent=480 // loop_header_branch
            %854 = sbr.rel (%p852) target = $region488
          $region485: #{tpu_custom_call.1} parent=480 // loop_body
            %v858 = vld [vmem:[%s856] sm:%s849]
            %859 = vst [vmem:[%s857] sm:%s849] %v858
          $region486: #{tpu_custom_call.1} parent=480 // loop_footer
            %s855 = sadd.s32 1, %s851
          $region487: #{tpu_custom_call.1} parent=480 // loop_footer_branch
            %850 = sbr.rel target = $region483
          $region488: #{tpu_custom_call.1} parent=480 // loop_exit
            _
        $region481: #{tpu_custom_call.1} parent=260 // pred_fallthru
          _
        // Predicated region
        $region500: #{tpu_custom_call.1} parent=260 // pred_check
          _
        $region501: #{tpu_custom_call.1} parent=260 // pred_check_branch
          %884 = sbr.rel (0) target = $region503
        $region502: #{tpu_custom_call.1} parent=260 // pred_region
          %885 = vsyncadd %s475, 16
        $region503: #{tpu_custom_call.1} parent=260 // pred_fallthru
          _
      $region261: #{tpu_custom_call.1} parent=255 // loop_footer
        %s468 = sadd.s32 1, %s464
      $region262: #{tpu_custom_call.1} parent=255 // loop_footer_branch
        %463 = sbr.rel target = $region258
      $region263: #{tpu_custom_call.1} parent=255 // loop_exit
        _
    $region256: #{tpu_custom_call.1} parent=1 // pred_fallthru
      _
    %s886 = smul.u32 %s24, 16
    loop: start=0, step=1, limit=2
    $region504: #{tpu_custom_call.1} parent=1 // loop_pre_header
      _
    $region505: #{tpu_custom_call.1} parent=1 // loop_header
      %s888 = sphi 0, %s892
      %p889 = scmp.ge.s32.totalorder %s888, 2
    $region506: #{tpu_custom_call.1} parent=1 // loop_header_branch
      %891 = sbr.rel (%p889) target = $region510
    $region507: #{tpu_custom_call.1} parent=1 // loop_body
      %s893 = scalar_lea.sflag [#allocation3], %s24
      %s894 = smul.u32 1, 1
      %s895 = sshll.u32 %s894, 4
      %896 = dma.done %s893, %s895
      %s897 = sshll.u32 %s894, 4
      %898 = dma.done %s893, %s897
      %s899 = sshll.u32 %s894, 4
      %900 = dma.done %s893, %s899
      %s901 = sshll.u32 %s894, 4
      %902 = dma.done %s893, %s901
      %s903 = sshll.u32 %s894, 4
      %904 = dma.done %s893, %s903
      %s905 = sshll.u32 %s894, 4
      %906 = dma.done %s893, %s905
      %s907 = sshll.u32 %s894, 4
      %908 = dma.done %s893, %s907
      %s909 = sshll.u32 %s894, 4
      %910 = dma.done %s893, %s909
    $region508: #{tpu_custom_call.1} parent=1 // loop_footer
      %s892 = sadd.s32 1, %s888
    $region509: #{tpu_custom_call.1} parent=1 // loop_footer_branch
      %887 = sbr.rel target = $region505
    $region510: #{tpu_custom_call.1} parent=1 // loop_exit
      _
    %s911 = scalar_lea.vmem [#allocation2], %s886
    %v912 = vld [vmem:[%s911] sm:$0xff]
    %v913 = vld [vmem:[%s911 + $0x8] sm:$0xff]
    %v914 = vmul.f32 %v912, 5.656854
    %v915 = vmul.f32 %v913, 5.656854
    %vm916 = vcmask 261120
    %917 = vst.msk [vmem:[#allocation6] sm:$0xff] %vm916, %v914
    %918 = vst.msk [vmem:[#allocation6 + $0x8] sm:$0xff] %vm916, %v915
    // Predicated region
    $region511: #{tpu_custom_call.1} parent=1 // pred_check
      _
    $region512: #{tpu_custom_call.1} parent=1 // pred_check_branch
      %920 = sbr.rel (0) target = $region514
    $region513: #{tpu_custom_call.1} parent=1 // pred_region
      %s921 = sadd.s32 0, 0
      %s922 = smul.u32 2, %s921
      %s924 = ssub.s32 256, 256
      %925 = vsyncadd [#allocation7], %s924
      %s926 = smul.addr %s922, 128
      %s927 = scalar_lea.hbm %s2, %s926
      %s928 = sshll.u32 [#allocation6], 4
      %s929 = int_to_ptr.vmem [resolvable:$true] %s928
      %934 = dma.vmem_to_hbm [thread:$0]  %s929, 256, %s927, [#allocation7], 128, 128, 8
    $region514: #{tpu_custom_call.1} parent=1 // pred_fallthru
      _
    // Predicated region
    $region515: #{tpu_custom_call.1} parent=1 // pred_check
      _
    $region516: #{tpu_custom_call.1} parent=1 // pred_check_branch
      %936 = sbr.rel (0) target = $region518
    $region517: #{tpu_custom_call.1} parent=1 // pred_region
      %937 = dma.done [#allocation7], 256
    $region518: #{tpu_custom_call.1} parent=1 // pred_fallthru
      _
    %938 = vsyncpa [#allocation7], 1
  %939 = vsyncmov [#allocation3]
  %s940 = vpop.sfrf %939
  %p941 = scmp.eq.s32.totalorder %s940, 0
  %p942 = pneg %p941
  %944 = shalt.err (%p942)
  %s945 = scalar_lea.sflag [#allocation3], 1
  %946 = vsyncmov %s945
  %s947 = vpop.sfrf %946
  %p948 = scmp.eq.s32.totalorder %s947, 0
  %p949 = pneg %p948
  %951 = shalt.err (%p949)

</llo_original>
